<compile_context>
chip_gen: v7x
topology: tpu7x:2x2x1
jax: 0.10.0
libtpu: 0.0.40
codegen_flags: <defaults>
</compile_context>

<pallas_src>
import functools

import jax
import jax.numpy as jnp
import numpy as np
from jax.experimental import pallas as pl
from jax.experimental.pallas import tpu as pltpu

_C1 = 0.01 ** 2
_C2 = 0.03 ** 2


def _gaussian_1d(window_size, sigma):
    x = np.arange(window_size, dtype=np.float64) - window_size // 2
    g = np.exp(-(x ** 2) / (2.0 * sigma ** 2))
    return (g / g.sum()).astype(np.float32)


def _conv_band_matrix(n, g):
    """Banded Toeplitz Gh[n, n] so that (y @ Gh)[i, k] equals the zero-padded
    1-D convolution of row y[i, :] with the taps g."""
    ws = len(g)
    pad = ws // 2
    idx = np.arange(n)
    diff = idx[:, None] - idx[None, :] + pad            # c - k + pad
    valid = (diff >= 0) & (diff < ws)
    taps = np.asarray(g, np.float32)[np.clip(diff, 0, ws - 1)]
    return np.where(valid, taps, 0.0).astype(np.float32)


def _ssim_image_kernel(x1_ref, x2_ref, gh_ref, part_ref, pv_ref, *,
                       h, w, pad, gauss):
    # Re-zero the halo rows every step: the grid axis is "parallel", so each
    # core has its own scratch and only sees a subset of steps -- a
    # step==0-only init would be wrong.  Interior rows are fully overwritten
    # by every blur() call, so only the halos need clearing.
    zeros_halo = jnp.zeros((pad, w), jnp.float32)
    pv_ref[0:pad, :] = zeros_halo
    pv_ref[pad + h:pad + h + pad, :] = zeros_halo

    gh = gh_ref[...]                        # (W, W) banded Gaussian, f32
    x1 = x1_ref[0].astype(jnp.float32)      # (H, W)
    x2 = x2_ref[0].astype(jnp.float32)

    def blur(x):
        # Vertical 11-tap pass (VPU, sublane-aligned slices).  Symmetric
        # taps: pre-add mirrored slices, multiply by 6 unique weights.
        pv_ref[pad:pad + h, :] = x
        y = gauss[pad] * x
        for d in range(1, pad + 1):
            y = y + gauss[pad - d] * (pv_ref[pad - d:pad - d + h, :] +
                                      pv_ref[pad + d:pad + d + h, :])
        # Horizontal 11-tap pass as a banded-Toeplitz matmul on the MXU:
        # lane-aligned, overlaps with the VPU work, f32 for accuracy.
        return jnp.dot(y, gh, preferred_element_type=jnp.float32)

    mu1 = blur(x1)
    mu2 = blur(x2)
    mu1_sq = mu1 * mu1
    mu2_sq = mu2 * mu2
    mu1_mu2 = mu1 * mu2
    sigma1_sq = blur(x1 * x1) - mu1_sq
    sigma2_sq = blur(x2 * x2) - mu2_sq
    sigma12 = blur(x1 * x2) - mu1_mu2

    num = (2.0 * mu1_mu2 + _C1) * (2.0 * sigma12 + _C2)
    den = (mu1_sq + mu2_sq + _C1) * (sigma1_sq + sigma2_sq + _C2)
    # Exact reciprocal (EUP); approx=True is ~3% faster but eats into the
    # rtol=1e-3 reference margin.
    ssim_map = num * pl.reciprocal(den, approx=False)

    # Per-step partial sum; the wrapper reduces across steps/images.
    part_ref[...] = jnp.sum(ssim_map).reshape(1, 1, 1)


def ssim_forward(img1, img2, window_size=11, sigma=1.5, size_average=True):
    assert img1.shape == img2.shape and img1.ndim == 4
    assert window_size % 2 == 1
    n, c, h, w = img1.shape
    nc = n * c
    pad = window_size // 2

    g = _gaussian_1d(window_size, sigma)
    gauss = tuple(float(v) for v in g)
    gh = jnp.asarray(_conv_band_matrix(w, g))           # (W, W) f32

    x1 = img1.reshape(nc, h, w)                         # metadata-only reshape
    x2 = img2.reshape(nc, h, w)

    kernel = functools.partial(_ssim_image_kernel, h=h, w=w, pad=pad,
                               gauss=gauss)

    # Per-step VMEM footprint: double-buffered inputs, band matrix, halo
    # scratch, plus headroom for the f32 elementwise temporaries.  Sized
    # explicitly so large images neither OOM nor silently degrade pipelining
    # (and stays well under v7x's 64 MiB physical VMEM for DRC map sizes).
    itemsize = img1.dtype.itemsize
    vmem_need = (2 * 2 * h * w * itemsize      # x1/x2, double buffered
                 + 2 * w * w * 4               # gh (double buffered)
                 + (h + 2 * pad) * w * 4       # halo scratch
                 + 16 * h * w * 4              # f32 temporaries headroom
                 + (2 << 20))
    vmem_limit = int(min(max(vmem_need, 32 << 20), 128 << 20))

    partials = pl.pallas_call(
        kernel,
        out_shape=jax.ShapeDtypeStruct((nc, 1, 1), jnp.float32),
        grid=(nc,),
        in_specs=[pl.BlockSpec((1, h, w), lambda i: (i, 0, 0)),
                  pl.BlockSpec((1, h, w), lambda i: (i, 0, 0)),
                  pl.BlockSpec((w, w), lambda i: (0, 0))],
        out_specs=pl.BlockSpec((1, 1, 1), lambda i: (i, 0, 0)),
        scratch_shapes=[pltpu.VMEM((h + 2 * pad, w), jnp.float32)],
        compiler_params=pltpu.CompilerParams(
            dimension_semantics=("parallel",),
            vmem_limit_bytes=vmem_limit),
    )(x1, x2, gh)

    per_image = partials.reshape(n, c)                  # sum over (H, W) per (n, c)
    if size_average:
        return jnp.sum(per_image) / jnp.float32(nc * h * w)
    return jnp.sum(per_image, axis=1) / jnp.float32(c * h * w)


class SSIM:
    """Pallas port of the PyTorch SSIM module (forward only)."""

    def __init__(self, window_size=11, size_average=True):
        self.window_size = window_size
        self.size_average = size_average

    def __call__(self, img1, img2):
        return ssim_forward(img1, img2, window_size=self.window_size,
                            size_average=self.size_average)


def _ssim_reference(img1, img2, window_size=11, sigma=1.5, size_average=True):
    """Pure-JAX reference matching the PyTorch _ssim."""
    n, c, h, w = img1.shape
    g = _gaussian_1d(window_size, sigma)
    w2d = np.outer(g, g).astype(np.float32)
    window = jnp.tile(jnp.asarray(w2d)[None, None], (c, 1, 1, 1))
    pad = window_size // 2

    def conv(x):
        return jax.lax.conv_general_dilated(
            x.astype(jnp.float32), window, (1, 1), [(pad, pad), (pad, pad)],
            dimension_numbers=('NCHW', 'OIHW', 'NCHW'),
            feature_group_count=c, precision=jax.lax.Precision.HIGHEST)

    mu1 = conv(img1)
    mu2 = conv(img2)
    mu1_sq = mu1 * mu1
    mu2_sq = mu2 * mu2
    mu1_mu2 = mu1 * mu2
    sigma1_sq = conv(img1 * img1) - mu1_sq
    sigma2_sq = conv(img2 * img2) - mu2_sq
    sigma12 = conv(img1 * img2) - mu1_mu2
    ssim_map = ((2 * mu1_mu2 + _C1) * (2 * sigma12 + _C2)) / \
               ((mu1_sq + mu2_sq + _C1) * (sigma1_sq + sigma2_sq + _C2))
    if size_average:
        return ssim_map.mean()
    return ssim_map.mean(axis=(1, 2, 3))


if __name__ == "__main__":
    key = jax.random.PRNGKey(0)
    k1, k2 = jax.random.split(key)

    N, C, H, W = 2, 4, 16, 16
    img1 = jax.random.uniform(k1, (N, C, H, W), dtype=jnp.float32)
    noise = 0.1 * jax.random.normal(k2, (N, C, H, W), dtype=jnp.float32)
    img2 = jnp.clip(img1 + noise, 0.0, 1.0)

    out = SSIM(window_size=11, size_average=True)(img1, img2)
    jax.block_until_ready(out)
    ref = _ssim_reference(img1, img2)
    assert jnp.allclose(out, ref, rtol=1e-3, atol=1e-4), (float(out), float(ref))

    out_ns = SSIM(window_size=11, size_average=False)(img1, img2)
    jax.block_until_ready(out_ns)
    ref_ns = _ssim_reference(img1, img2, size_average=False)
    assert jnp.allclose(out_ns, ref_ns, rtol=1e-3, atol=1e-4)

    print("KERNEL_OK")
</pallas_src>

<mosaic_0001>
module attributes {stable_mosaic.version = 11 : i64} {
  func.func @_ssim_image_kernel(%arg0: i32, %arg1: memref<1x16x16xf32, #tpu.memory_space<vmem>>, %arg2: memref<1x16x16xf32, #tpu.memory_space<vmem>>, %arg3: memref<16x16xf32, #tpu.memory_space<vmem>>, %arg4: memref<1x1x1xf32, #tpu.memory_space<vmem>>, %arg5: memref<26x16xf32, #tpu.memory_space<vmem>>) attributes {dimension_semantics = [#tpu.dimension_semantics<parallel>], iteration_bounds = array<i64: 8>, scalar_prefetch = 0 : i64, scratch_operands = 1 : i64, tpu.core_type = #tpu.core_type<tc>, window_params = [{transform_indices = @transform_0, window_bounds = array<i64: 1, 16, 16>}, {transform_indices = @transform_1, window_bounds = array<i64: 1, 16, 16>}, {pipeline_mode = #tpu.pipeline_mode<synchronous>, transform_indices = @transform_2, window_bounds = array<i64: 16, 16>}, {transform_indices = @transform_3, window_bounds = array<i64: 1, 1, 1>}]} {
    %cst = arith.constant 0.000000e+00 : f32
    %0 = vector.broadcast %cst : f32 to vector<5x16xf32>
    %c0 = arith.constant 0 : index
    %c0_0 = arith.constant 0 : index
    %1 = vector.load %arg5[%c0, %c0_0] : memref<26x16xf32, #tpu.memory_space<vmem>>, vector<5x16xf32>
    tpu.vector_store %arg5[%c0, %c0_0], %0 {strides = array<i32>} : memref<26x16xf32, #tpu.memory_space<vmem>>, vector<5x16xf32>,
    %c21 = arith.constant 21 : index
    %c0_1 = arith.constant 0 : index
    %2 = vector.load %arg5[%c21, %c0_1] : memref<26x16xf32, #tpu.memory_space<vmem>>, vector<5x16xf32>
    tpu.vector_store %arg5[%c21, %c0_1], %0 {strides = array<i32>} : memref<26x16xf32, #tpu.memory_space<vmem>>, vector<5x16xf32>,
    %c0_2 = arith.constant 0 : index
    %c0_3 = arith.constant 0 : index
    %3 = vector.load %arg3[%c0_2, %c0_3] : memref<16x16xf32, #tpu.memory_space<vmem>>, vector<16x16xf32>
    %c0_4 = arith.constant 0 : index
    %c0_5 = arith.constant 0 : index
    %c0_6 = arith.constant 0 : index
    %4 = vector.load %arg1[%c0_4, %c0_5, %c0_6] : memref<1x16x16xf32, #tpu.memory_space<vmem>>, vector<1x16x16xf32>
    %5 = vector.shape_cast %4 : vector<1x16x16xf32> to vector<16x16xf32>
    %c0_7 = arith.constant 0 : index
    %c0_8 = arith.constant 0 : index
    %c0_9 = arith.constant 0 : index
    %6 = vector.load %arg2[%c0_7, %c0_8, %c0_9] : memref<1x16x16xf32, #tpu.memory_space<vmem>>, vector<1x16x16xf32>
    %7 = vector.shape_cast %6 : vector<1x16x16xf32> to vector<16x16xf32>
    %c5 = arith.constant 5 : index
    %c0_10 = arith.constant 0 : index
    %8 = vector.load %arg5[%c5, %c0_10] : memref<26x16xf32, #tpu.memory_space<vmem>>, vector<16x16xf32>
    tpu.vector_store %arg5[%c5, %c0_10], %5 {strides = array<i32>} : memref<26x16xf32, #tpu.memory_space<vmem>>, vector<16x16xf32>,
    %cst_11 = arith.constant 0.266011715 : f32
    %9 = vector.broadcast %cst_11 : f32 to vector<16x16xf32>
    %10 = arith.mulf %9, %5 : vector<16x16xf32>
    %c4 = arith.constant 4 : index
    %c0_12 = arith.constant 0 : index
    %11 = vector.load %arg5[%c4, %c0_12] : memref<26x16xf32, #tpu.memory_space<vmem>>, vector<16x16xf32>
    %c6 = arith.constant 6 : index
    %c0_13 = arith.constant 0 : index
    %12 = vector.load %arg5[%c6, %c0_13] : memref<26x16xf32, #tpu.memory_space<vmem>>, vector<16x16xf32>
    %13 = arith.addf %11, %12 : vector<16x16xf32>
    %cst_14 = arith.constant 0.213005543 : f32
    %14 = vector.broadcast %cst_14 : f32 to vector<16x16xf32>
    %15 = arith.mulf %14, %13 : vector<16x16xf32>
    %16 = arith.addf %10, %15 : vector<16x16xf32>
    %c3 = arith.constant 3 : index
    %c0_15 = arith.constant 0 : index
    %17 = vector.load %arg5[%c3, %c0_15] : memref<26x16xf32, #tpu.memory_space<vmem>>, vector<16x16xf32>
    %c7 = arith.constant 7 : index
    %c0_16 = arith.constant 0 : index
    %18 = vector.load %arg5[%c7, %c0_16] : memref<26x16xf32, #tpu.memory_space<vmem>>, vector<16x16xf32>
    %19 = arith.addf %17, %18 : vector<16x16xf32>
    %cst_17 = arith.constant 0.109360687 : f32
    %20 = vector.broadcast %cst_17 : f32 to vector<16x16xf32>
    %21 = arith.mulf %20, %19 : vector<16x16xf32>
    %22 = arith.addf %16, %21 : vector<16x16xf32>
    %c2 = arith.constant 2 : index
    %c0_18 = arith.constant 0 : index
    %23 = vector.load %arg5[%c2, %c0_18] : memref<26x16xf32, #tpu.memory_space<vmem>>, vector<16x16xf32>
    %c8 = arith.constant 8 : index
    %c0_19 = arith.constant 0 : index
    %24 = vector.load %arg5[%c8, %c0_19] : memref<26x16xf32, #tpu.memory_space<vmem>>, vector<16x16xf32>
    %25 = arith.addf %23, %24 : vector<16x16xf32>
    %cst_20 = arith.constant 0.0360007733 : f32
    %26 = vector.broadcast %cst_20 : f32 to vector<16x16xf32>
    %27 = arith.mulf %26, %25 : vector<16x16xf32>
    %28 = arith.addf %22, %27 : vector<16x16xf32>
    %c1 = arith.constant 1 : index
    %c0_21 = arith.constant 0 : index
    %29 = vector.load %arg5[%c1, %c0_21] : memref<26x16xf32, #tpu.memory_space<vmem>>, vector<16x16xf32>
    %c9 = arith.constant 9 : index
    %c0_22 = arith.constant 0 : index
    %30 = vector.load %arg5[%c9, %c0_22] : memref<26x16xf32, #tpu.memory_space<vmem>>, vector<16x16xf32>
    %31 = arith.addf %29, %30 : vector<16x16xf32>
    %cst_23 = arith.constant 0.00759875821 : f32
    %32 = vector.broadcast %cst_23 : f32 to vector<16x16xf32>
    %33 = arith.mulf %32, %31 : vector<16x16xf32>
    %34 = arith.addf %28, %33 : vector<16x16xf32>
    %c0_24 = arith.constant 0 : index
    %c0_25 = arith.constant 0 : index
    %35 = vector.load %arg5[%c0_24, %c0_25] : memref<26x16xf32, #tpu.memory_space<vmem>>, vector<16x16xf32>
    %c10 = arith.constant 10 : index
    %c0_26 = arith.constant 0 : index
    %36 = vector.load %arg5[%c10, %c0_26] : memref<26x16xf32, #tpu.memory_space<vmem>>, vector<16x16xf32>
    %37 = arith.addf %35, %36 : vector<16x16xf32>
    %cst_27 = arith.constant 0.00102838012 : f32
    %38 = vector.broadcast %cst_27 : f32 to vector<16x16xf32>
    %39 = arith.mulf %38, %37 : vector<16x16xf32>
    %40 = arith.addf %34, %39 : vector<16x16xf32>
    %cst_28 = arith.constant dense<0.000000e+00> : vector<16x16xf32>
    %41 = tpu.matmul %40, %3, %cst_28 {dimension_numbers = #tpu.dot_dimension_numbers<[1], [0], [0], [1], [0, 0, 1, 1], [], []>} : vector<16x16xf32>, vector<16x16xf32>, vector<16x16xf32> -> vector<16x16xf32>
    %c5_29 = arith.constant 5 : index
    %c0_30 = arith.constant 0 : index
    %42 = vector.load %arg5[%c5_29, %c0_30] : memref<26x16xf32, #tpu.memory_space<vmem>>, vector<16x16xf32>
    tpu.vector_store %arg5[%c5_29, %c0_30], %7 {strides = array<i32>} : memref<26x16xf32, #tpu.memory_space<vmem>>, vector<16x16xf32>,
    %cst_31 = arith.constant 0.266011715 : f32
    %43 = vector.broadcast %cst_31 : f32 to vector<16x16xf32>
    %44 = arith.mulf %43, %7 : vector<16x16xf32>
    %c4_32 = arith.constant 4 : index
    %c0_33 = arith.constant 0 : index
    %45 = vector.load %arg5[%c4_32, %c0_33] : memref<26x16xf32, #tpu.memory_space<vmem>>, vector<16x16xf32>
    %c6_34 = arith.constant 6 : index
    %c0_35 = arith.constant 0 : index
    %46 = vector.load %arg5[%c6_34, %c0_35] : memref<26x16xf32, #tpu.memory_space<vmem>>, vector<16x16xf32>
    %47 = arith.addf %45, %46 : vector<16x16xf32>
    %cst_36 = arith.constant 0.213005543 : f32
    %48 = vector.broadcast %cst_36 : f32 to vector<16x16xf32>
    %49 = arith.mulf %48, %47 : vector<16x16xf32>
    %50 = arith.addf %44, %49 : vector<16x16xf32>
    %c3_37 = arith.constant 3 : index
    %c0_38 = arith.constant 0 : index
    %51 = vector.load %arg5[%c3_37, %c0_38] : memref<26x16xf32, #tpu.memory_space<vmem>>, vector<16x16xf32>
    %c7_39 = arith.constant 7 : index
    %c0_40 = arith.constant 0 : index
    %52 = vector.load %arg5[%c7_39, %c0_40] : memref<26x16xf32, #tpu.memory_space<vmem>>, vector<16x16xf32>
    %53 = arith.addf %51, %52 : vector<16x16xf32>
    %cst_41 = arith.constant 0.109360687 : f32
    %54 = vector.broadcast %cst_41 : f32 to vector<16x16xf32>
    %55 = arith.mulf %54, %53 : vector<16x16xf32>
    %56 = arith.addf %50, %55 : vector<16x16xf32>
    %c2_42 = arith.constant 2 : index
    %c0_43 = arith.constant 0 : index
    %57 = vector.load %arg5[%c2_42, %c0_43] : memref<26x16xf32, #tpu.memory_space<vmem>>, vector<16x16xf32>
    %c8_44 = arith.constant 8 : index
    %c0_45 = arith.constant 0 : index
    %58 = vector.load %arg5[%c8_44, %c0_45] : memref<26x16xf32, #tpu.memory_space<vmem>>, vector<16x16xf32>
    %59 = arith.addf %57, %58 : vector<16x16xf32>
    %cst_46 = arith.constant 0.0360007733 : f32
    %60 = vector.broadcast %cst_46 : f32 to vector<16x16xf32>
    %61 = arith.mulf %60, %59 : vector<16x16xf32>
    %62 = arith.addf %56, %61 : vector<16x16xf32>
    %c1_47 = arith.constant 1 : index
    %c0_48 = arith.constant 0 : index
    %63 = vector.load %arg5[%c1_47, %c0_48] : memref<26x16xf32, #tpu.memory_space<vmem>>, vector<16x16xf32>
    %c9_49 = arith.constant 9 : index
    %c0_50 = arith.constant 0 : index
    %64 = vector.load %arg5[%c9_49, %c0_50] : memref<26x16xf32, #tpu.memory_space<vmem>>, vector<16x16xf32>
    %65 = arith.addf %63, %64 : vector<16x16xf32>
    %cst_51 = arith.constant 0.00759875821 : f32
    %66 = vector.broadcast %cst_51 : f32 to vector<16x16xf32>
    %67 = arith.mulf %66, %65 : vector<16x16xf32>
    %68 = arith.addf %62, %67 : vector<16x16xf32>
    %c0_52 = arith.constant 0 : index
    %c0_53 = arith.constant 0 : index
    %69 = vector.load %arg5[%c0_52, %c0_53] : memref<26x16xf32, #tpu.memory_space<vmem>>, vector<16x16xf32>
    %c10_54 = arith.constant 10 : index
    %c0_55 = arith.constant 0 : index
    %70 = vector.load %arg5[%c10_54, %c0_55] : memref<26x16xf32, #tpu.memory_space<vmem>>, vector<16x16xf32>
    %71 = arith.addf %69, %70 : vector<16x16xf32>
    %cst_56 = arith.constant 0.00102838012 : f32
    %72 = vector.broadcast %cst_56 : f32 to vector<16x16xf32>
    %73 = arith.mulf %72, %71 : vector<16x16xf32>
    %74 = arith.addf %68, %73 : vector<16x16xf32>
    %cst_57 = arith.constant dense<0.000000e+00> : vector<16x16xf32>
    %75 = tpu.matmul %74, %3, %cst_57 {dimension_numbers = #tpu.dot_dimension_numbers<[1], [0], [0], [1], [0, 0, 1, 1], [], []>} : vector<16x16xf32>, vector<16x16xf32>, vector<16x16xf32> -> vector<16x16xf32>
    %76 = arith.mulf %41, %41 : vector<16x16xf32>
    %77 = arith.mulf %75, %75 : vector<16x16xf32>
    %78 = arith.mulf %41, %75 : vector<16x16xf32>
    %79 = arith.mulf %5, %5 : vector<16x16xf32>
    %c5_58 = arith.constant 5 : index
    %c0_59 = arith.constant 0 : index
    %80 = vector.load %arg5[%c5_58, %c0_59] : memref<26x16xf32, #tpu.memory_space<vmem>>, vector<16x16xf32>
    tpu.vector_store %arg5[%c5_58, %c0_59], %79 {strides = array<i32>} : memref<26x16xf32, #tpu.memory_space<vmem>>, vector<16x16xf32>,
    %cst_60 = arith.constant 0.266011715 : f32
    %81 = vector.broadcast %cst_60 : f32 to vector<16x16xf32>
    %82 = arith.mulf %81, %79 : vector<16x16xf32>
    %c4_61 = arith.constant 4 : index
    %c0_62 = arith.constant 0 : index
    %83 = vector.load %arg5[%c4_61, %c0_62] : memref<26x16xf32, #tpu.memory_space<vmem>>, vector<16x16xf32>
    %c6_63 = arith.constant 6 : index
    %c0_64 = arith.constant 0 : index
    %84 = vector.load %arg5[%c6_63, %c0_64] : memref<26x16xf32, #tpu.memory_space<vmem>>, vector<16x16xf32>
    %85 = arith.addf %83, %84 : vector<16x16xf32>
    %cst_65 = arith.constant 0.213005543 : f32
    %86 = vector.broadcast %cst_65 : f32 to vector<16x16xf32>
    %87 = arith.mulf %86, %85 : vector<16x16xf32>
    %88 = arith.addf %82, %87 : vector<16x16xf32>
    %c3_66 = arith.constant 3 : index
    %c0_67 = arith.constant 0 : index
    %89 = vector.load %arg5[%c3_66, %c0_67] : memref<26x16xf32, #tpu.memory_space<vmem>>, vector<16x16xf32>
    %c7_68 = arith.constant 7 : index
    %c0_69 = arith.constant 0 : index
    %90 = vector.load %arg5[%c7_68, %c0_69] : memref<26x16xf32, #tpu.memory_space<vmem>>, vector<16x16xf32>
    %91 = arith.addf %89, %90 : vector<16x16xf32>
    %cst_70 = arith.constant 0.109360687 : f32
    %92 = vector.broadcast %cst_70 : f32 to vector<16x16xf32>
    %93 = arith.mulf %92, %91 : vector<16x16xf32>
    %94 = arith.addf %88, %93 : vector<16x16xf32>
    %c2_71 = arith.constant 2 : index
    %c0_72 = arith.constant 0 : index
    %95 = vector.load %arg5[%c2_71, %c0_72] : memref<26x16xf32, #tpu.memory_space<vmem>>, vector<16x16xf32>
    %c8_73 = arith.constant 8 : index
    %c0_74 = arith.constant 0 : index
    %96 = vector.load %arg5[%c8_73, %c0_74] : memref<26x16xf32, #tpu.memory_space<vmem>>, vector<16x16xf32>
    %97 = arith.addf %95, %96 : vector<16x16xf32>
    %cst_75 = arith.constant 0.0360007733 : f32
    %98 = vector.broadcast %cst_75 : f32 to vector<16x16xf32>
    %99 = arith.mulf %98, %97 : vector<16x16xf32>
    %100 = arith.addf %94, %99 : vector<16x16xf32>
    %c1_76 = arith.constant 1 : index
    %c0_77 = arith.constant 0 : index
    %101 = vector.load %arg5[%c1_76, %c0_77] : memref<26x16xf32, #tpu.memory_space<vmem>>, vector<16x16xf32>
    %c9_78 = arith.constant 9 : index
    %c0_79 = arith.constant 0 : index
    %102 = vector.load %arg5[%c9_78, %c0_79] : memref<26x16xf32, #tpu.memory_space<vmem>>, vector<16x16xf32>
    %103 = arith.addf %101, %102 : vector<16x16xf32>
    %cst_80 = arith.constant 0.00759875821 : f32
    %104 = vector.broadcast %cst_80 : f32 to vector<16x16xf32>
    %105 = arith.mulf %104, %103 : vector<16x16xf32>
    %106 = arith.addf %100, %105 : vector<16x16xf32>
    %c0_81 = arith.constant 0 : index
    %c0_82 = arith.constant 0 : index
    %107 = vector.load %arg5[%c0_81, %c0_82] : memref<26x16xf32, #tpu.memory_space<vmem>>, vector<16x16xf32>
    %c10_83 = arith.constant 10 : index
    %c0_84 = arith.constant 0 : index
    %108 = vector.load %arg5[%c10_83, %c0_84] : memref<26x16xf32, #tpu.memory_space<vmem>>, vector<16x16xf32>
    %109 = arith.addf %107, %108 : vector<16x16xf32>
    %cst_85 = arith.constant 0.00102838012 : f32
    %110 = vector.broadcast %cst_85 : f32 to vector<16x16xf32>
    %111 = arith.mulf %110, %109 : vector<16x16xf32>
    %112 = arith.addf %106, %111 : vector<16x16xf32>
    %cst_86 = arith.constant dense<0.000000e+00> : vector<16x16xf32>
    %113 = tpu.matmul %112, %3, %cst_86 {dimension_numbers = #tpu.dot_dimension_numbers<[1], [0], [0], [1], [0, 0, 1, 1], [], []>} : vector<16x16xf32>, vector<16x16xf32>, vector<16x16xf32> -> vector<16x16xf32>
    %114 = arith.subf %113, %76 : vector<16x16xf32>
    %115 = arith.mulf %7, %7 : vector<16x16xf32>
    %c5_87 = arith.constant 5 : index
    %c0_88 = arith.constant 0 : index
    %116 = vector.load %arg5[%c5_87, %c0_88] : memref<26x16xf32, #tpu.memory_space<vmem>>, vector<16x16xf32>
    tpu.vector_store %arg5[%c5_87, %c0_88], %115 {strides = array<i32>} : memref<26x16xf32, #tpu.memory_space<vmem>>, vector<16x16xf32>,
    %cst_89 = arith.constant 0.266011715 : f32
    %117 = vector.broadcast %cst_89 : f32 to vector<16x16xf32>
    %118 = arith.mulf %117, %115 : vector<16x16xf32>
    %c4_90 = arith.constant 4 : index
    %c0_91 = arith.constant 0 : index
    %119 = vector.load %arg5[%c4_90, %c0_91] : memref<26x16xf32, #tpu.memory_space<vmem>>, vector<16x16xf32>
    %c6_92 = arith.constant 6 : index
    %c0_93 = arith.constant 0 : index
    %120 = vector.load %arg5[%c6_92, %c0_93] : memref<26x16xf32, #tpu.memory_space<vmem>>, vector<16x16xf32>
    %121 = arith.addf %119, %120 : vector<16x16xf32>
    %cst_94 = arith.constant 0.213005543 : f32
    %122 = vector.broadcast %cst_94 : f32 to vector<16x16xf32>
    %123 = arith.mulf %122, %121 : vector<16x16xf32>
    %124 = arith.addf %118, %123 : vector<16x16xf32>
    %c3_95 = arith.constant 3 : index
    %c0_96 = arith.constant 0 : index
    %125 = vector.load %arg5[%c3_95, %c0_96] : memref<26x16xf32, #tpu.memory_space<vmem>>, vector<16x16xf32>
    %c7_97 = arith.constant 7 : index
    %c0_98 = arith.constant 0 : index
    %126 = vector.load %arg5[%c7_97, %c0_98] : memref<26x16xf32, #tpu.memory_space<vmem>>, vector<16x16xf32>
    %127 = arith.addf %125, %126 : vector<16x16xf32>
    %cst_99 = arith.constant 0.109360687 : f32
    %128 = vector.broadcast %cst_99 : f32 to vector<16x16xf32>
    %129 = arith.mulf %128, %127 : vector<16x16xf32>
    %130 = arith.addf %124, %129 : vector<16x16xf32>
    %c2_100 = arith.constant 2 : index
    %c0_101 = arith.constant 0 : index
    %131 = vector.load %arg5[%c2_100, %c0_101] : memref<26x16xf32, #tpu.memory_space<vmem>>, vector<16x16xf32>
    %c8_102 = arith.constant 8 : index
    %c0_103 = arith.constant 0 : index
    %132 = vector.load %arg5[%c8_102, %c0_103] : memref<26x16xf32, #tpu.memory_space<vmem>>, vector<16x16xf32>
    %133 = arith.addf %131, %132 : vector<16x16xf32>
    %cst_104 = arith.constant 0.0360007733 : f32
    %134 = vector.broadcast %cst_104 : f32 to vector<16x16xf32>
    %135 = arith.mulf %134, %133 : vector<16x16xf32>
    %136 = arith.addf %130, %135 : vector<16x16xf32>
    %c1_105 = arith.constant 1 : index
    %c0_106 = arith.constant 0 : index
    %137 = vector.load %arg5[%c1_105, %c0_106] : memref<26x16xf32, #tpu.memory_space<vmem>>, vector<16x16xf32>
    %c9_107 = arith.constant 9 : index
    %c0_108 = arith.constant 0 : index
    %138 = vector.load %arg5[%c9_107, %c0_108] : memref<26x16xf32, #tpu.memory_space<vmem>>, vector<16x16xf32>
    %139 = arith.addf %137, %138 : vector<16x16xf32>
    %cst_109 = arith.constant 0.00759875821 : f32
    %140 = vector.broadcast %cst_109 : f32 to vector<16x16xf32>
    %141 = arith.mulf %140, %139 : vector<16x16xf32>
    %142 = arith.addf %136, %141 : vector<16x16xf32>
    %c0_110 = arith.constant 0 : index
    %c0_111 = arith.constant 0 : index
    %143 = vector.load %arg5[%c0_110, %c0_111] : memref<26x16xf32, #tpu.memory_space<vmem>>, vector<16x16xf32>
    %c10_112 = arith.constant 10 : index
    %c0_113 = arith.constant 0 : index
    %144 = vector.load %arg5[%c10_112, %c0_113] : memref<26x16xf32, #tpu.memory_space<vmem>>, vector<16x16xf32>
    %145 = arith.addf %143, %144 : vector<16x16xf32>
    %cst_114 = arith.constant 0.00102838012 : f32
    %146 = vector.broadcast %cst_114 : f32 to vector<16x16xf32>
    %147 = arith.mulf %146, %145 : vector<16x16xf32>
    %148 = arith.addf %142, %147 : vector<16x16xf32>
    %cst_115 = arith.constant dense<0.000000e+00> : vector<16x16xf32>
    %149 = tpu.matmul %148, %3, %cst_115 {dimension_numbers = #tpu.dot_dimension_numbers<[1], [0], [0], [1], [0, 0, 1, 1], [], []>} : vector<16x16xf32>, vector<16x16xf32>, vector<16x16xf32> -> vector<16x16xf32>
    %150 = arith.subf %149, %77 : vector<16x16xf32>
    %151 = arith.mulf %5, %7 : vector<16x16xf32>
    %c5_116 = arith.constant 5 : index
    %c0_117 = arith.constant 0 : index
    %152 = vector.load %arg5[%c5_116, %c0_117] : memref<26x16xf32, #tpu.memory_space<vmem>>, vector<16x16xf32>
    tpu.vector_store %arg5[%c5_116, %c0_117], %151 {strides = array<i32>} : memref<26x16xf32, #tpu.memory_space<vmem>>, vector<16x16xf32>,
    %cst_118 = arith.constant 0.266011715 : f32
    %153 = vector.broadcast %cst_118 : f32 to vector<16x16xf32>
    %154 = arith.mulf %153, %151 : vector<16x16xf32>
    %c4_119 = arith.constant 4 : index
    %c0_120 = arith.constant 0 : index
    %155 = vector.load %arg5[%c4_119, %c0_120] : memref<26x16xf32, #tpu.memory_space<vmem>>, vector<16x16xf32>
    %c6_121 = arith.constant 6 : index
    %c0_122 = arith.constant 0 : index
    %156 = vector.load %arg5[%c6_121, %c0_122] : memref<26x16xf32, #tpu.memory_space<vmem>>, vector<16x16xf32>
    %157 = arith.addf %155, %156 : vector<16x16xf32>
    %cst_123 = arith.constant 0.213005543 : f32
    %158 = vector.broadcast %cst_123 : f32 to vector<16x16xf32>
    %159 = arith.mulf %158, %157 : vector<16x16xf32>
    %160 = arith.addf %154, %159 : vector<16x16xf32>
    %c3_124 = arith.constant 3 : index
    %c0_125 = arith.constant 0 : index
    %161 = vector.load %arg5[%c3_124, %c0_125] : memref<26x16xf32, #tpu.memory_space<vmem>>, vector<16x16xf32>
    %c7_126 = arith.constant 7 : index
    %c0_127 = arith.constant 0 : index
    %162 = vector.load %arg5[%c7_126, %c0_127] : memref<26x16xf32, #tpu.memory_space<vmem>>, vector<16x16xf32>
    %163 = arith.addf %161, %162 : vector<16x16xf32>
    %cst_128 = arith.constant 0.109360687 : f32
    %164 = vector.broadcast %cst_128 : f32 to vector<16x16xf32>
    %165 = arith.mulf %164, %163 : vector<16x16xf32>
    %166 = arith.addf %160, %165 : vector<16x16xf32>
    %c2_129 = arith.constant 2 : index
    %c0_130 = arith.constant 0 : index
    %167 = vector.load %arg5[%c2_129, %c0_130] : memref<26x16xf32, #tpu.memory_space<vmem>>, vector<16x16xf32>
    %c8_131 = arith.constant 8 : index
    %c0_132 = arith.constant 0 : index
    %168 = vector.load %arg5[%c8_131, %c0_132] : memref<26x16xf32, #tpu.memory_space<vmem>>, vector<16x16xf32>
    %169 = arith.addf %167, %168 : vector<16x16xf32>
    %cst_133 = arith.constant 0.0360007733 : f32
    %170 = vector.broadcast %cst_133 : f32 to vector<16x16xf32>
    %171 = arith.mulf %170, %169 : vector<16x16xf32>
    %172 = arith.addf %166, %171 : vector<16x16xf32>
    %c1_134 = arith.constant 1 : index
    %c0_135 = arith.constant 0 : index
    %173 = vector.load %arg5[%c1_134, %c0_135] : memref<26x16xf32, #tpu.memory_space<vmem>>, vector<16x16xf32>
    %c9_136 = arith.constant 9 : index
    %c0_137 = arith.constant 0 : index
    %174 = vector.load %arg5[%c9_136, %c0_137] : memref<26x16xf32, #tpu.memory_space<vmem>>, vector<16x16xf32>
    %175 = arith.addf %173, %174 : vector<16x16xf32>
    %cst_138 = arith.constant 0.00759875821 : f32
    %176 = vector.broadcast %cst_138 : f32 to vector<16x16xf32>
    %177 = arith.mulf %176, %175 : vector<16x16xf32>
    %178 = arith.addf %172, %177 : vector<16x16xf32>
    %c0_139 = arith.constant 0 : index
    %c0_140 = arith.constant 0 : index
    %179 = vector.load %arg5[%c0_139, %c0_140] : memref<26x16xf32, #tpu.memory_space<vmem>>, vector<16x16xf32>
    %c10_141 = arith.constant 10 : index
    %c0_142 = arith.constant 0 : index
    %180 = vector.load %arg5[%c10_141, %c0_142] : memref<26x16xf32, #tpu.memory_space<vmem>>, vector<16x16xf32>
    %181 = arith.addf %179, %180 : vector<16x16xf32>
    %cst_143 = arith.constant 0.00102838012 : f32
    %182 = vector.broadcast %cst_143 : f32 to vector<16x16xf32>
    %183 = arith.mulf %182, %181 : vector<16x16xf32>
    %184 = arith.addf %178, %183 : vector<16x16xf32>
    %cst_144 = arith.constant dense<0.000000e+00> : vector<16x16xf32>
    %185 = tpu.matmul %184, %3, %cst_144 {dimension_numbers = #tpu.dot_dimension_numbers<[1], [0], [0], [1], [0, 0, 1, 1], [], []>} : vector<16x16xf32>, vector<16x16xf32>, vector<16x16xf32> -> vector<16x16xf32>
    %186 = arith.subf %185, %78 : vector<16x16xf32>
    %cst_145 = arith.constant 2.000000e+00 : f32
    %187 = vector.broadcast %cst_145 : f32 to vector<16x16xf32>
    %188 = arith.mulf %187, %78 : vector<16x16xf32>
    %cst_146 = arith.constant 9.99999974E-5 : f32
    %189 = vector.broadcast %cst_146 : f32 to vector<16x16xf32>
    %190 = arith.addf %188, %189 : vector<16x16xf32>
    %cst_147 = arith.constant 2.000000e+00 : f32
    %191 = vector.broadcast %cst_147 : f32 to vector<16x16xf32>
    %192 = arith.mulf %191, %186 : vector<16x16xf32>
    %cst_148 = arith.constant 8.99999984E-4 : f32
    %193 = vector.broadcast %cst_148 : f32 to vector<16x16xf32>
    %194 = arith.addf %192, %193 : vector<16x16xf32>
    %195 = arith.mulf %190, %194 : vector<16x16xf32>
    %196 = arith.addf %76, %77 : vector<16x16xf32>
    %cst_149 = arith.constant 9.99999974E-5 : f32
    %197 = vector.broadcast %cst_149 : f32 to vector<16x16xf32>
    %198 = arith.addf %196, %197 : vector<16x16xf32>
    %199 = arith.addf %114, %150 : vector<16x16xf32>
    %cst_150 = arith.constant 8.99999984E-4 : f32
    %200 = vector.broadcast %cst_150 : f32 to vector<16x16xf32>
    %201 = arith.addf %199, %200 : vector<16x16xf32>
    %202 = arith.mulf %198, %201 : vector<16x16xf32>
    %203 = tpu.reciprocal %202 : vector<16x16xf32> -> vector<16x16xf32>
    %204 = arith.mulf %195, %203 : vector<16x16xf32>
    %205 = vector.shape_cast %204 : vector<16x16xf32> to vector<1x16x16xf32>
    %cst_151 = arith.constant dense<0.000000e+00> : vector<1xf32>
    %206 = vector.multi_reduction <add>, %205, %cst_151 [1, 2] : vector<1x16x16xf32> to vector<1xf32>
    %207 = vector.shape_cast %206 : vector<1xf32> to vector<1x1x1xf32>
    %208 = vector.extract %207[0, 0, 0] : f32 from vector<1x1x1xf32>
    %209 = vector.broadcast %208 : f32 to vector<1x1x1xf32>
    %c0_152 = arith.constant 0 : index
    %c0_153 = arith.constant 0 : index
    %c0_154 = arith.constant 0 : index
    %210 = vector.load %arg4[%c0_152, %c0_153, %c0_154] : memref<1x1x1xf32, #tpu.memory_space<vmem>>, vector<1x1x1xf32>
    tpu.vector_store %arg4[%c0_152, %c0_153, %c0_154], %209 {strides = array<i32>} : memref<1x1x1xf32, #tpu.memory_space<vmem>>, vector<1x1x1xf32>,
    return
  }
  func.func @transform_0(%arg0: i32) -> (i32, i32, i32) {
    %c0_i32 = arith.constant 0 : i32
    %c0_i32_0 = arith.constant 0 : i32
    %c0_i32_1 = arith.constant 0 : i32
    return %arg0, %c0_i32, %c0_i32_0 : i32, i32, i32
  }
  func.func @transform_1(%arg0: i32) -> (i32, i32, i32) {
    %c0_i32 = arith.constant 0 : i32
    %c0_i32_0 = arith.constant 0 : i32
    %c0_i32_1 = arith.constant 0 : i32
    return %arg0, %c0_i32, %c0_i32_0 : i32, i32, i32
  }
  func.func @transform_2(%arg0: i32) -> (i32, i32) {
    %c0_i32 = arith.constant 0 : i32
    %c0_i32_0 = arith.constant 0 : i32
    %c0_i32_1 = arith.constant 0 : i32
    return %c0_i32, %c0_i32_0 : i32, i32
  }
  func.func @transform_3(%arg0: i32) -> (i32, i32, i32) {
    %c0_i32 = arith.constant 0 : i32
    %c0_i32_0 = arith.constant 0 : i32
    %c0_i32_1 = arith.constant 0 : i32
    return %arg0, %c0_i32, %c0_i32_0 : i32, i32, i32
  }
}

</mosaic_0001>

<llo_original>
// kernel: tpu_custom_call.1
$region0: #{tpu_custom_call.1}
  #allocation0 [shape = 'u32[]', space=smem, size = 0x4, offset = 0x4, fixed_abs, tag = 'smem constant byte address 0x4 - core index']
  #allocation1 [shape = 'u32[144,128]{1,0:T(1,128)}', space=vmem, size = 0x12000, scoped, tag = 'internal scratch']
  #allocation2 [shape = 'f32[26,16]{1,0:T(8,128)}', space=vmem, size = 0x4000, scoped, tag = 'scratch operand']
  %s0 = inlined_call_operand.hbm [shape: f32[8,16,16], index: 0, kind: input, shape index: {}]
  %s1 = inlined_call_operand.hbm [shape: f32[8,16,16], index: 1, kind: input, shape index: {}]
  %s2 = inlined_call_operand.hbm [shape: f32[16,16], index: 2, kind: input, shape index: {}]
  %s3 = inlined_call_operand.vmem [shape: f32[8,1,1], index: 3, kind: output, shape index: {}]
  %s4 = sld [smem:[#allocation0]]
  $region57: #{tpu_custom_call.1} parent=0
    _
  %s6 = ssub.s32 1, %s4
  %s7 = scalar_select 0, %s6, %s4
  $region1: #{tpu_custom_call.1} parent=0
    #allocation3 [shape = 'u8[16384]{0}', space=vmem, size = 0x4000, scoped, tag = 'input window, operand 0']
    #allocation4 [shape = 's32[2]{0}', space=sflag, size = 0x8, scoped, tag = 'scoped memory for tpu_custom_call.1']
    #allocation5 [shape = 'u8[16384]{0}', space=vmem, size = 0x4000, scoped, tag = 'input window, operand 1']
    #allocation6 [shape = 's32[2]{0}', space=sflag, size = 0x8, scoped, tag = 'scoped memory for tpu_custom_call.1']
    #allocation7 [shape = 'u8[8192]{0}', space=vmem, size = 0x2000, scoped, tag = 'input window, operand 2, single buffered']
    %8 = vsyncpa [#allocation4], 0
    %s9 = scalar_lea.sflag [#allocation4], 1
    %10 = vsyncpa %s9, 0
    %11 = vsyncpa [#allocation6], 0
    %s12 = scalar_lea.sflag [#allocation6], 1
    %13 = vsyncpa %s12, 0
    loop: start=0, step=1, limit=10
    $region2: #{tpu_custom_call.1} parent=1 // loop_pre_header
      _
    $region3: #{tpu_custom_call.1} parent=1 // loop_header
      %s15 = sphi 0, %s19
      %p16 = scmp.ge.s32.totalorder %s15, 10
      %s25 = sphi 0, %s27
      %s28 = sphi 0, %s25
      %s29 = sphi 0, %s28
      %s45 = sphi 0, %s29
      %s51 = sphi 0, %s53
      %s54 = sphi 0, %s51
      %s55 = sphi 0, %s54
      %s71 = sphi 0, %s55
      %s75 = sphi 0, %s75
      %s77 = sphi 0, %s75
      %s78 = sphi 0, %s77
      %s92 = sphi 0, %s78
      %s98 = sphi 0, %s100
      %s101 = sphi 0, %s98
      %s102 = sphi 0, %s101
      %s118 = sphi 0, %s102
    $region4: #{tpu_custom_call.1} parent=1 // loop_header_branch
      %18 = sbr.rel (%p16) target = $region8
    $region5: #{tpu_custom_call.1} parent=1 // loop_body
      %s20 = ssub.s32 %s15, 1
      %s21 = ssub.s32 %s15, 2
      %s22 = sadd.s32 %s15, 1
      %s23 = ssub.s32 %s15, %s22
      %p24 = scmp.eq.s32.totalorder %s23, 0
      %s26 = sadd.s32 %s25, 1
      %s27 = scalar_select %p24, %s25, %s26
      %p30 = pneg %p24
      %p31 = scmp.eq.s32.totalorder %s15, 7
      %p32 = por %p30, %p31
      %p33 = scmp.ne.s32.totalorder %s25, %s28
      %p34 = scmp.eq.s32.totalorder %s15, 0
      %p35 = por %p33, %p34
      %p36 = scmp.ne.s32.totalorder %s25, %s28
      %p37 = scmp.eq.s32.totalorder %s20, 7
      %p38 = por %p36, %p37
      %p39 = scmp.ne.s32.totalorder %s28, %s29
      %p40 = scmp.eq.s32.totalorder %s20, 0
      %p41 = por %p39, %p40
      %p42 = scmp.ne.s32.totalorder %s28, %s29
      %p43 = scmp.eq.s32.totalorder %s21, 7
      %p44 = por %p42, %p43
      %p46 = scmp.ne.s32.totalorder %s29, %s45
      %p47 = scmp.eq.s32.totalorder %s21, 0
      %p48 = por %p46, %p47
      %s49 = ssub.s32 %s15, %s22
      %p50 = scmp.eq.s32.totalorder %s49, 0
      %s52 = sadd.s32 %s51, 1
      %s53 = scalar_select %p50, %s51, %s52
      %p56 = pneg %p50
      %p57 = scmp.eq.s32.totalorder %s15, 7
      %p58 = por %p56, %p57
      %p59 = scmp.ne.s32.totalorder %s51, %s54
      %p60 = scmp.eq.s32.totalorder %s15, 0
      %p61 = por %p59, %p60
      %p62 = scmp.ne.s32.totalorder %s51, %s54
      %p63 = scmp.eq.s32.totalorder %s20, 7
      %p64 = por %p62, %p63
      %p65 = scmp.ne.s32.totalorder %s54, %s55
      %p66 = scmp.eq.s32.totalorder %s20, 0
      %p67 = por %p65, %p66
      %p68 = scmp.ne.s32.totalorder %s54, %s55
      %p69 = scmp.eq.s32.totalorder %s21, 7
      %p70 = por %p68, %p69
      %p72 = scmp.ne.s32.totalorder %s55, %s71
      %p73 = scmp.eq.s32.totalorder %s21, 0
      %p74 = por %p72, %p73
      %s76 = sadd.s32 %s75, 1
      %p79 = scmp.eq.s32.totalorder %s15, 7
      %p80 = scmp.ne.s32.totalorder %s75, %s77
      %p81 = scmp.eq.s32.totalorder %s15, 0
      %p82 = por %p80, %p81
      %p83 = scmp.ne.s32.totalorder %s75, %s77
      %p84 = scmp.eq.s32.totalorder %s20, 7
      %p85 = por %p83, %p84
      %p86 = scmp.ne.s32.totalorder %s77, %s78
      %p87 = scmp.eq.s32.totalorder %s20, 0
      %p88 = por %p86, %p87
      %p89 = scmp.ne.s32.totalorder %s77, %s78
      %p90 = scmp.eq.s32.totalorder %s21, 7
      %p91 = por %p89, %p90
      %p93 = scmp.ne.s32.totalorder %s78, %s92
      %p94 = scmp.eq.s32.totalorder %s21, 0
      %p95 = por %p93, %p94
      %s96 = ssub.s32 %s15, %s22
      %p97 = scmp.eq.s32.totalorder %s96, 0
      %s99 = sadd.s32 %s98, 1
      %s100 = scalar_select %p97, %s98, %s99
      %p103 = pneg %p97
      %p104 = scmp.eq.s32.totalorder %s15, 7
      %p105 = por %p103, %p104
      %p106 = scmp.ne.s32.totalorder %s98, %s101
      %p107 = scmp.eq.s32.totalorder %s15, 0
      %p108 = por %p106, %p107
      %p109 = scmp.ne.s32.totalorder %s98, %s101
      %p110 = scmp.eq.s32.totalorder %s20, 7
      %p111 = por %p109, %p110
      %p112 = scmp.ne.s32.totalorder %s101, %s102
      %p113 = scmp.eq.s32.totalorder %s20, 0
      %p114 = por %p112, %p113
      %p115 = scmp.ne.s32.totalorder %s101, %s102
      %p116 = scmp.eq.s32.totalorder %s21, 7
      %p117 = por %p115, %p116
      %p119 = scmp.ne.s32.totalorder %s102, %s118
      %p120 = scmp.eq.s32.totalorder %s21, 0
      %p121 = por %p119, %p120
      %p122 = scmp.le.s32.totalorder 1, %s15
      %p123 = scmp.lt.s32.totalorder %s15, 9
      %p124 = pnand %p122, %p123
      %p125 = pneg %p124
      // Predicated region
      $region9: #{tpu_custom_call.1} parent=5 // pred_check
        _
      $region10: #{tpu_custom_call.1} parent=5 // pred_check_branch
        %127 = sbr.rel (%p124) target = $region12
      $region11: #{tpu_custom_call.1} parent=5 // pred_region
        %s128 = ssub.s32 %s15, 1
        // Predicated region
        $region13: #{tpu_custom_call.1} parent=11 // pred_check
          %p129 = pneg %p88
        $region14: #{tpu_custom_call.1} parent=11 // pred_check_branch
          %131 = sbr.rel (%p129) target = $region16
        $region15: #{tpu_custom_call.1} parent=11 // pred_region
          %s133 = ssub.s32 256, 256
          %134 = vsyncadd [#allocation6], %s133
          %s135 = sshll.u32 [#allocation7], 4
          %s136 = int_to_ptr.vmem [resolvable:$true] %s135
          %141 = dma.hbm_to_vmem [thread:$0]  %s2, 256, %s136, [#allocation6], 128, 128, 8
        $region16: #{tpu_custom_call.1} parent=11 // pred_fallthru
          _
      $region12: #{tpu_custom_call.1} parent=5 // pred_fallthru
        _
      %p142 = scmp.lt.s32.totalorder %s15, 8
      // Predicated region
      $region17: #{tpu_custom_call.1} parent=5 // pred_check
        %p143 = pneg %p142
      $region18: #{tpu_custom_call.1} parent=5 // pred_check_branch
        %145 = sbr.rel (%p143) target = $region20
      $region19: #{tpu_custom_call.1} parent=5 // pred_region
        // Predicated region
        $region21: #{tpu_custom_call.1} parent=19 // pred_check
          %p146 = pneg %p35
        $region22: #{tpu_custom_call.1} parent=19 // pred_check_branch
          %148 = sbr.rel (%p146) target = $region24
        $region23: #{tpu_custom_call.1} parent=19 // pred_region
          %s149 = sand.u32 %s25, 1
          %s150 = scalar_lea.sflag [#allocation4], %s149
          %s151 = sand.u32 %s25, 1
          %s152 = smul.addr %s151, 16
          %s153 = scalar_lea.vmem [#allocation3], %s152
          %s155 = ssub.s32 256, 256
          %156 = vsyncadd %s150, %s155
          %s157 = smul.addr %s15, 2
          %s158 = smul.addr %s157, 128
          %s159 = scalar_lea.hbm %s0, %s158
          %s160 = sshll.u32 %s153, 4
          %s161 = int_to_ptr.vmem [resolvable:$true] %s160
          %166 = dma.hbm_to_vmem [thread:$0]  %s159, 256, %s161, %s150, 128, 128, 8
        $region24: #{tpu_custom_call.1} parent=19 // pred_fallthru
          _
        // Predicated region
        $region25: #{tpu_custom_call.1} parent=19 // pred_check
          %p167 = pneg %p61
        $region26: #{tpu_custom_call.1} parent=19 // pred_check_branch
          %169 = sbr.rel (%p167) target = $region28
        $region27: #{tpu_custom_call.1} parent=19 // pred_region
          %s170 = sand.u32 %s15, 1
          %s171 = scalar_lea.sflag [#allocation6], %s170
          %s172 = sand.u32 %s51, 1
          %s173 = smul.addr %s172, 16
          %s174 = scalar_lea.vmem [#allocation5], %s173
          %s176 = ssub.s32 256, 256
          %177 = vsyncadd %s171, %s176
          %s178 = smul.addr %s15, 2
          %s179 = smul.addr %s178, 128
          %s180 = scalar_lea.hbm %s1, %s179
          %s181 = sshll.u32 %s174, 4
          %s182 = int_to_ptr.vmem [resolvable:$true] %s181
          %187 = dma.hbm_to_vmem [thread:$0]  %s180, 256, %s182, %s171, 128, 128, 8
        $region28: #{tpu_custom_call.1} parent=19 // pred_fallthru
          _
      $region20: #{tpu_custom_call.1} parent=5 // pred_fallthru
        _
      %p188 = scmp.le.s32.totalorder 1, %s15
      %p189 = scmp.lt.s32.totalorder %s15, 9
      %p190 = pnand %p188, %p189
      %p191 = pneg %p190
      // Predicated region
      $region29: #{tpu_custom_call.1} parent=5 // pred_check
        _
      $region30: #{tpu_custom_call.1} parent=5 // pred_check_branch
        %193 = sbr.rel (%p190) target = $region32
      $region31: #{tpu_custom_call.1} parent=5 // pred_region
        %s194 = ssub.s32 %s15, 1
        %s195 = sand.u32 %s28, 1
        %s196 = scalar_lea.sflag [#allocation4], %s195
        %s197 = sand.u32 %s28, 1
        %s198 = smul.addr %s197, 16
        %s199 = scalar_lea.vmem [#allocation3], %s198
        // Predicated region
        $region33: #{tpu_custom_call.1} parent=31 // pred_check
          %p200 = pneg %p41
        $region34: #{tpu_custom_call.1} parent=31 // pred_check_branch
          %202 = sbr.rel (%p200) target = $region36
        $region35: #{tpu_custom_call.1} parent=31 // pred_region
          %203 = dma.done %s196, 256
        $region36: #{tpu_custom_call.1} parent=31 // pred_fallthru
          _
        %s204 = sand.u32 %s20, 1
        %s205 = scalar_lea.sflag [#allocation6], %s204
        %s206 = sand.u32 %s54, 1
        %s207 = smul.addr %s206, 16
        %s208 = scalar_lea.vmem [#allocation5], %s207
        // Predicated region
        $region37: #{tpu_custom_call.1} parent=31 // pred_check
          %p209 = pneg %p67
        $region38: #{tpu_custom_call.1} parent=31 // pred_check_branch
          %211 = sbr.rel (%p209) target = $region40
        $region39: #{tpu_custom_call.1} parent=31 // pred_region
          %212 = dma.done %s205, 256
        $region40: #{tpu_custom_call.1} parent=31 // pred_fallthru
          _
        // Predicated region
        $region41: #{tpu_custom_call.1} parent=31 // pred_check
          %p213 = pneg %p88
        $region42: #{tpu_custom_call.1} parent=31 // pred_check_branch
          %215 = sbr.rel (%p213) target = $region44
        $region43: #{tpu_custom_call.1} parent=31 // pred_region
          %216 = dma.done [#allocation6], 256
        $region44: #{tpu_custom_call.1} parent=31 // pred_fallthru
          _
        %s217 = sand.u32 %s28, 1
        %s218 = scalar_lea.sflag [#allocation4], %s217
        %s219 = sand.u32 %s28, 1
        %s220 = smul.addr %s219, 16
        %s221 = scalar_lea.vmem [#allocation3], %s220
        %p222 = pneg %p41
        %p223 = pneg %p38
        %s224 = sand.u32 %s20, 1
        %s225 = scalar_lea.sflag [#allocation6], %s224
        %s226 = sand.u32 %s54, 1
        %s227 = smul.addr %s226, 16
        %s228 = scalar_lea.vmem [#allocation5], %s227
        %p229 = pneg %p67
        %p230 = pneg %p64
        %p231 = pneg %p88
        %p232 = pneg %p85
        %p233 = pneg %p114
        %p234 = pneg %p111
        %p235 = scmp.lt.s32.totalorder %s20, 7
        %s236 = scalar_select %p235, %s20, 7
        %s237 = scalar_lea.vmem %s3, %s236
        %p238 = scmp.lt.s32.totalorder %s20, 7
        %s239 = scalar_select %p238, %s20, 7
        %s240 = scalar_lea.vmem %s3, %s239
        %vm241 = vcmask 126976
        %242 = vst.msk [vmem:[#allocation2] sm:$0x1f] %vm241, 0.0
        %243 = vst.msk [vmem:[#allocation2 + $0x15] sm:$0x1f] %vm241, 0.0
        %v244 = vld [vmem:[#allocation7] sm:$0xff]
        %v245 = vld [vmem:[#allocation7 + $0x8] sm:$0xff]
        %v246 = vld [vmem:[%s199] sm:$0xff]
        %v247 = vld [vmem:[%s199 + $0x8] sm:$0xff]
        %v248 = vld [vmem:[%s208] sm:$0xff]
        %v249 = vld [vmem:[%s208 + $0x8] sm:$0xff]
        %vm250 = vcmask 130048
        %251 = vst.msk [vmem:[#allocation2 + $0x5] sm:$0xff] %vm250, %v246
        %252 = vst.msk [vmem:[#allocation2 + $0xd] sm:$0xff] %vm250, %v247
        %v253 = vmul.f32 %v246, 0.26601171
        %v254 = vmul.f32 %v247, 0.26601171
        %v255 = vld [vmem:[#allocation2 + $0x4] sm:$0xff]
        %v256 = vld [vmem:[#allocation2 + $0xc] sm:$0xff]
        %v257 = vld [vmem:[#allocation2 + $0x6] sm:$0xff]
        %v258 = vld [vmem:[#allocation2 + $0xe] sm:$0xff]
        %v259 = vadd.f32 %v255, %v257
        %v260 = vadd.f32 %v256, %v258
        %v261 = vmul.f32 %v259, 0.21300554
        %v262 = vmul.f32 %v260, 0.21300554
        %v263 = vadd.f32 %v253, %v261
        %v264 = vadd.f32 %v254, %v262
        %v265 = vld [vmem:[#allocation2 + $0x3] sm:$0xff]
        %v266 = vld [vmem:[#allocation2 + $0xb] sm:$0xff]
        %v267 = vld [vmem:[#allocation2 + $0x7] sm:$0xff]
        %v268 = vld [vmem:[#allocation2 + $0xf] sm:$0xff]
        %v269 = vadd.f32 %v265, %v267
        %v270 = vadd.f32 %v266, %v268
        %v271 = vmul.f32 %v269, 0.10936069
        %v272 = vmul.f32 %v270, 0.10936069
        %v273 = vadd.f32 %v263, %v271
        %v274 = vadd.f32 %v264, %v272
        %v275 = vld [vmem:[#allocation2 + $0x2] sm:$0xff]
        %v276 = vld [vmem:[#allocation2 + $0xa] sm:$0xff]
        %v277 = vld [vmem:[#allocation2 + $0x8] sm:$0xff]
        %v278 = vld [vmem:[#allocation2 + $0x10] sm:$0xff]
        %v279 = vadd.f32 %v275, %v277
        %v280 = vadd.f32 %v276, %v278
        %v281 = vmul.f32 %v279, 0.036000773
        %v282 = vmul.f32 %v280, 0.036000773
        %v283 = vadd.f32 %v273, %v281
        %v284 = vadd.f32 %v274, %v282
        %v285 = vld [vmem:[#allocation2 + $0x1] sm:$0xff]
        %v286 = vld [vmem:[#allocation2 + $0x9] sm:$0xff]
        %v287 = vld [vmem:[#allocation2 + $0x11] sm:$0xff]
        %v288 = vadd.f32 %v285, %v286
        %v289 = vadd.f32 %v286, %v287
        %v290 = vmul.f32 %v288, 0.007598758
        %v291 = vmul.f32 %v289, 0.007598758
        %v292 = vadd.f32 %v283, %v290
        %v293 = vadd.f32 %v284, %v291
        %v294 = vld [vmem:[#allocation2] sm:$0xff]
        %v295 = vld [vmem:[#allocation2 + $0x12] sm:$0xff]
        %v296 = vadd.f32 %v294, %v276
        %v297 = vadd.f32 %v277, %v295
        %v298 = vmul.f32 %v296, 0.0010283801
        %v299 = vmul.f32 %v297, 0.0010283801
        %v300 = vadd.f32 %v292, %v298
        %v301 = vadd.f32 %v293, %v299
        %v303 = vsel %vm250, %v300, 0
        %v306 = vsel %vm250, %v301, 0
        %308 = vmatprep.subr.mxu0 0.0
        %309 = vmatpush1.msra.mxu0 %v244
        %310 = vmatprep.subr.mxu0 0.0
        %311 = vmatpush1.msra.mxu0 %v245
        %312 = vmatprep.subr.mxu0 0.0
        %313 = vmatpush1.msra.mxu0 0.0
        %314 = vmatprep.subr.mxu0 0.0
        %315 = vmatpush1.msra.mxu0 0.0
        %316 = vmatprep.subr.mxu0 0.0
        %317 = vmatpush1.msra.mxu0 0.0
        %318 = vmatprep.subr.mxu0 0.0
        %319 = vmatpush1.msra.mxu0 0.0
        %320 = vmatprep.subr.mxu0 0.0
        %321 = vmatpush1.msra.mxu0 0.0
        %322 = vmatprep.subr.mxu0 0.0
        %323 = vmatpush1.msra.mxu0 0.0
        %324 = vmatprep.subr.mxu0 0.0
        %325 = vmatpush1.msra.mxu0 0.0
        %326 = vmatprep.subr.mxu0 0.0
        %327 = vmatpush1.msra.mxu0 0.0
        %328 = vmatprep.subr.mxu0 0.0
        %329 = vmatpush1.msra.mxu0 0.0
        %330 = vmatprep.subr.mxu0 0.0
        %331 = vmatpush1.msra.mxu0 0.0
        %332 = vmatprep.subr.mxu0 0.0
        %333 = vmatpush1.msra.mxu0 0.0
        %334 = vmatprep.subr.mxu0 0.0
        %335 = vmatpush1.msra.mxu0 0.0
        %336 = vmatprep.subr.mxu0 0.0
        %337 = vmatpush1.msra.mxu0 0.0
        %338 = vmatprep.subr.mxu0 0.0
        %339 = vmatpush1.msra.mxu0 0.0
        %340 = vmatprep.subr.mxu0 0.0
        %341 = vmatpush1.msra.mxu0 0.0
        %342 = vmatprep.subr.mxu0 0.0
        %343 = vmatpush1.msra.mxu0 0.0
        %344 = vmatprep.subr.mxu0 0.0
        %345 = vmatpush1.msra.mxu0 0.0
        %346 = vmatprep.subr.mxu0 0.0
        %347 = vmatpush1.msra.mxu0 0.0
        %348 = vmatprep.subr.mxu0 0.0
        %349 = vmatpush1.msra.mxu0 0.0
        %350 = vmatprep.subr.mxu0 0.0
        %351 = vmatpush1.msra.mxu0 0.0
        %352 = vmatprep.subr.mxu0 0.0
        %353 = vmatpush1.msra.mxu0 0.0
        %354 = vmatprep.subr.mxu0 0.0
        %355 = vmatpush1.msra.mxu0 0.0
        %356 = vmatprep.subr.mxu0 0.0
        %357 = vmatpush1.msra.mxu0 0.0
        %358 = vmatprep.subr.mxu0 0.0
        %359 = vmatpush1.msra.mxu0 0.0
        %360 = vmatprep.subr.mxu0 0.0
        %361 = vmatpush1.msra.mxu0 0.0
        %362 = vmatprep.subr.mxu0 0.0
        %363 = vmatpush1.msra.mxu0 0.0
        %364 = vmatprep.subr.mxu0 0.0
        %365 = vmatpush1.msra.mxu0 0.0
        %366 = vmatprep.subr.mxu0 0.0
        %367 = vmatpush1.msra.mxu0 0.0
        %368 = vmatprep.subr.mxu0 0.0
        %369 = vmatpush1.msra.mxu0 0.0
        %370 = vmatprep.subr.mxu0 0.0
        %371 = vmatpush1.msra.mxu0 0.0
        %372 = vmatprep.mubr.f32.mxu0 0.0
        %373 = vmatmul.mubr.f32.gmra.mrb[0].mxu0 %v303
        %v374 = vpop.f32.mrb[0].mxu0
        %v375 = vadd.f32 0.0, %v374
        %v376 = vpop.f32.mrb[0].mxu0
        %377 = vmatprep.mubr.f32.mxu0 0.0
        %378 = vmatmul.mubr.f32.gmra.mrb[0].mxu0 %v306
        %v379 = vpop.f32.mrb[0].mxu0
        %v380 = vadd.f32 0.0, %v379
        %v381 = vpop.f32.mrb[0].mxu0
        %382 = vdwg.mxu0
        %383 = vst.msk [vmem:[#allocation2 + $0x5] sm:$0xff] %vm250, %v248
        %384 = vst.msk [vmem:[#allocation2 + $0xd] sm:$0xff] %vm250, %v249
        %v385 = vmul.f32 %v248, 0.26601171
        %v386 = vmul.f32 %v249, 0.26601171
        %v387 = vld [vmem:[#allocation2 + $0x4] sm:$0xff]
        %v388 = vld [vmem:[#allocation2 + $0xc] sm:$0xff]
        %v389 = vld [vmem:[#allocation2 + $0x6] sm:$0xff]
        %v390 = vld [vmem:[#allocation2 + $0xe] sm:$0xff]
        %v391 = vadd.f32 %v387, %v389
        %v392 = vadd.f32 %v388, %v390
        %v393 = vmul.f32 %v391, 0.21300554
        %v394 = vmul.f32 %v392, 0.21300554
        %v395 = vadd.f32 %v385, %v393
        %v396 = vadd.f32 %v386, %v394
        %v397 = vld [vmem:[#allocation2 + $0x3] sm:$0xff]
        %v398 = vld [vmem:[#allocation2 + $0xb] sm:$0xff]
        %v399 = vld [vmem:[#allocation2 + $0x7] sm:$0xff]
        %v400 = vld [vmem:[#allocation2 + $0xf] sm:$0xff]
        %v401 = vadd.f32 %v397, %v399
        %v402 = vadd.f32 %v398, %v400
        %v403 = vmul.f32 %v401, 0.10936069
        %v404 = vmul.f32 %v402, 0.10936069
        %v405 = vadd.f32 %v395, %v403
        %v406 = vadd.f32 %v396, %v404
        %v407 = vld [vmem:[#allocation2 + $0x2] sm:$0xff]
        %v408 = vld [vmem:[#allocation2 + $0xa] sm:$0xff]
        %v409 = vld [vmem:[#allocation2 + $0x8] sm:$0xff]
        %v410 = vld [vmem:[#allocation2 + $0x10] sm:$0xff]
        %v411 = vadd.f32 %v407, %v409
        %v412 = vadd.f32 %v408, %v410
        %v413 = vmul.f32 %v411, 0.036000773
        %v414 = vmul.f32 %v412, 0.036000773
        %v415 = vadd.f32 %v405, %v413
        %v416 = vadd.f32 %v406, %v414
        %v417 = vld [vmem:[#allocation2 + $0x1] sm:$0xff]
        %v418 = vld [vmem:[#allocation2 + $0x9] sm:$0xff]
        %v419 = vld [vmem:[#allocation2 + $0x11] sm:$0xff]
        %v420 = vadd.f32 %v417, %v418
        %v421 = vadd.f32 %v418, %v419
        %v422 = vmul.f32 %v420, 0.007598758
        %v423 = vmul.f32 %v421, 0.007598758
        %v424 = vadd.f32 %v415, %v422
        %v425 = vadd.f32 %v416, %v423
        %v426 = vld [vmem:[#allocation2] sm:$0xff]
        %v427 = vld [vmem:[#allocation2 + $0x12] sm:$0xff]
        %v428 = vadd.f32 %v426, %v408
        %v429 = vadd.f32 %v409, %v427
        %v430 = vmul.f32 %v428, 0.0010283801
        %v431 = vmul.f32 %v429, 0.0010283801
        %v432 = vadd.f32 %v424, %v430
        %v433 = vadd.f32 %v425, %v431
        %v435 = vsel %vm250, %v432, 0
        %v438 = vsel %vm250, %v433, 0
        %440 = vmatprep.subr.mxu0 0.0
        %441 = vmatpush1.msra.mxu0 %v244
        %442 = vmatprep.subr.mxu0 0.0
        %443 = vmatpush1.msra.mxu0 %v245
        %444 = vmatprep.subr.mxu0 0.0
        %445 = vmatpush1.msra.mxu0 0.0
        %446 = vmatprep.subr.mxu0 0.0
        %447 = vmatpush1.msra.mxu0 0.0
        %448 = vmatprep.subr.mxu0 0.0
        %449 = vmatpush1.msra.mxu0 0.0
        %450 = vmatprep.subr.mxu0 0.0
        %451 = vmatpush1.msra.mxu0 0.0
        %452 = vmatprep.subr.mxu0 0.0
        %453 = vmatpush1.msra.mxu0 0.0
        %454 = vmatprep.subr.mxu0 0.0
        %455 = vmatpush1.msra.mxu0 0.0
        %456 = vmatprep.subr.mxu0 0.0
        %457 = vmatpush1.msra.mxu0 0.0
        %458 = vmatprep.subr.mxu0 0.0
        %459 = vmatpush1.msra.mxu0 0.0
        %460 = vmatprep.subr.mxu0 0.0
        %461 = vmatpush1.msra.mxu0 0.0
        %462 = vmatprep.subr.mxu0 0.0
        %463 = vmatpush1.msra.mxu0 0.0
        %464 = vmatprep.subr.mxu0 0.0
        %465 = vmatpush1.msra.mxu0 0.0
        %466 = vmatprep.subr.mxu0 0.0
        %467 = vmatpush1.msra.mxu0 0.0
        %468 = vmatprep.subr.mxu0 0.0
        %469 = vmatpush1.msra.mxu0 0.0
        %470 = vmatprep.subr.mxu0 0.0
        %471 = vmatpush1.msra.mxu0 0.0
        %472 = vmatprep.subr.mxu0 0.0
        %473 = vmatpush1.msra.mxu0 0.0
        %474 = vmatprep.subr.mxu0 0.0
        %475 = vmatpush1.msra.mxu0 0.0
        %476 = vmatprep.subr.mxu0 0.0
        %477 = vmatpush1.msra.mxu0 0.0
        %478 = vmatprep.subr.mxu0 0.0
        %479 = vmatpush1.msra.mxu0 0.0
        %480 = vmatprep.subr.mxu0 0.0
        %481 = vmatpush1.msra.mxu0 0.0
        %482 = vmatprep.subr.mxu0 0.0
        %483 = vmatpush1.msra.mxu0 0.0
        %484 = vmatprep.subr.mxu0 0.0
        %485 = vmatpush1.msra.mxu0 0.0
        %486 = vmatprep.subr.mxu0 0.0
        %487 = vmatpush1.msra.mxu0 0.0
        %488 = vmatprep.subr.mxu0 0.0
        %489 = vmatpush1.msra.mxu0 0.0
        %490 = vmatprep.subr.mxu0 0.0
        %491 = vmatpush1.msra.mxu0 0.0
        %492 = vmatprep.subr.mxu0 0.0
        %493 = vmatpush1.msra.mxu0 0.0
        %494 = vmatprep.subr.mxu0 0.0
        %495 = vmatpush1.msra.mxu0 0.0
        %496 = vmatprep.subr.mxu0 0.0
        %497 = vmatpush1.msra.mxu0 0.0
        %498 = vmatprep.subr.mxu0 0.0
        %499 = vmatpush1.msra.mxu0 0.0
        %500 = vmatprep.subr.mxu0 0.0
        %501 = vmatpush1.msra.mxu0 0.0
        %502 = vmatprep.subr.mxu0 0.0
        %503 = vmatpush1.msra.mxu0 0.0
        %504 = vmatprep.mubr.f32.mxu0 0.0
        %505 = vmatmul.mubr.f32.gmra.mrb[0].mxu0 %v435
        %v506 = vpop.f32.mrb[0].mxu0
        %v507 = vadd.f32 0.0, %v506
        %v508 = vpop.f32.mrb[0].mxu0
        %509 = vmatprep.mubr.f32.mxu0 0.0
        %510 = vmatmul.mubr.f32.gmra.mrb[0].mxu0 %v438
        %v511 = vpop.f32.mrb[0].mxu0
        %v512 = vadd.f32 0.0, %v511
        %v513 = vpop.f32.mrb[0].mxu0
        %514 = vdwg.mxu0
        %v515 = vmul.f32 %v375, %v375
        %v516 = vmul.f32 %v380, %v380
        %v517 = vmul.f32 %v507, %v507
        %v518 = vmul.f32 %v512, %v512
        %v519 = vmul.f32 %v375, %v507
        %v520 = vmul.f32 %v380, %v512
        %v521 = vmul.f32 %v246, %v246
        %v522 = vmul.f32 %v247, %v247
        %523 = vst.msk [vmem:[#allocation2 + $0x5] sm:$0xff] %vm250, %v521
        %524 = vst.msk [vmem:[#allocation2 + $0xd] sm:$0xff] %vm250, %v522
        %v525 = vmul.f32 %v521, 0.26601171
        %v526 = vmul.f32 %v522, 0.26601171
        %v527 = vld [vmem:[#allocation2 + $0x4] sm:$0xff]
        %v528 = vld [vmem:[#allocation2 + $0xc] sm:$0xff]
        %v529 = vld [vmem:[#allocation2 + $0x6] sm:$0xff]
        %v530 = vld [vmem:[#allocation2 + $0xe] sm:$0xff]
        %v531 = vadd.f32 %v527, %v529
        %v532 = vadd.f32 %v528, %v530
        %v533 = vmul.f32 %v531, 0.21300554
        %v534 = vmul.f32 %v532, 0.21300554
        %v535 = vadd.f32 %v525, %v533
        %v536 = vadd.f32 %v526, %v534
        %v537 = vld [vmem:[#allocation2 + $0x3] sm:$0xff]
        %v538 = vld [vmem:[#allocation2 + $0xb] sm:$0xff]
        %v539 = vld [vmem:[#allocation2 + $0x7] sm:$0xff]
        %v540 = vld [vmem:[#allocation2 + $0xf] sm:$0xff]
        %v541 = vadd.f32 %v537, %v539
        %v542 = vadd.f32 %v538, %v540
        %v543 = vmul.f32 %v541, 0.10936069
        %v544 = vmul.f32 %v542, 0.10936069
        %v545 = vadd.f32 %v535, %v543
        %v546 = vadd.f32 %v536, %v544
        %v547 = vld [vmem:[#allocation2 + $0x2] sm:$0xff]
        %v548 = vld [vmem:[#allocation2 + $0xa] sm:$0xff]
        %v549 = vld [vmem:[#allocation2 + $0x8] sm:$0xff]
        %v550 = vld [vmem:[#allocation2 + $0x10] sm:$0xff]
        %v551 = vadd.f32 %v547, %v549
        %v552 = vadd.f32 %v548, %v550
        %v553 = vmul.f32 %v551, 0.036000773
        %v554 = vmul.f32 %v552, 0.036000773
        %v555 = vadd.f32 %v545, %v553
        %v556 = vadd.f32 %v546, %v554
        %v557 = vld [vmem:[#allocation2 + $0x1] sm:$0xff]
        %v558 = vld [vmem:[#allocation2 + $0x9] sm:$0xff]
        %v559 = vld [vmem:[#allocation2 + $0x11] sm:$0xff]
        %v560 = vadd.f32 %v557, %v558
        %v561 = vadd.f32 %v558, %v559
        %v562 = vmul.f32 %v560, 0.007598758
        %v563 = vmul.f32 %v561, 0.007598758
        %v564 = vadd.f32 %v555, %v562
        %v565 = vadd.f32 %v556, %v563
        %v566 = vld [vmem:[#allocation2] sm:$0xff]
        %v567 = vld [vmem:[#allocation2 + $0x12] sm:$0xff]
        %v568 = vadd.f32 %v566, %v548
        %v569 = vadd.f32 %v549, %v567
        %v570 = vmul.f32 %v568, 0.0010283801
        %v571 = vmul.f32 %v569, 0.0010283801
        %v572 = vadd.f32 %v564, %v570
        %v573 = vadd.f32 %v565, %v571
        %v575 = vsel %vm250, %v572, 0
        %v578 = vsel %vm250, %v573, 0
        %580 = vmatprep.subr.mxu0 0.0
        %581 = vmatpush1.msra.mxu0 %v244
        %582 = vmatprep.subr.mxu0 0.0
        %583 = vmatpush1.msra.mxu0 %v245
        %584 = vmatprep.subr.mxu0 0.0
        %585 = vmatpush1.msra.mxu0 0.0
        %586 = vmatprep.subr.mxu0 0.0
        %587 = vmatpush1.msra.mxu0 0.0
        %588 = vmatprep.subr.mxu0 0.0
        %589 = vmatpush1.msra.mxu0 0.0
        %590 = vmatprep.subr.mxu0 0.0
        %591 = vmatpush1.msra.mxu0 0.0
        %592 = vmatprep.subr.mxu0 0.0
        %593 = vmatpush1.msra.mxu0 0.0
        %594 = vmatprep.subr.mxu0 0.0
        %595 = vmatpush1.msra.mxu0 0.0
        %596 = vmatprep.subr.mxu0 0.0
        %597 = vmatpush1.msra.mxu0 0.0
        %598 = vmatprep.subr.mxu0 0.0
        %599 = vmatpush1.msra.mxu0 0.0
        %600 = vmatprep.subr.mxu0 0.0
        %601 = vmatpush1.msra.mxu0 0.0
        %602 = vmatprep.subr.mxu0 0.0
        %603 = vmatpush1.msra.mxu0 0.0
        %604 = vmatprep.subr.mxu0 0.0
        %605 = vmatpush1.msra.mxu0 0.0
        %606 = vmatprep.subr.mxu0 0.0
        %607 = vmatpush1.msra.mxu0 0.0
        %608 = vmatprep.subr.mxu0 0.0
        %609 = vmatpush1.msra.mxu0 0.0
        %610 = vmatprep.subr.mxu0 0.0
        %611 = vmatpush1.msra.mxu0 0.0
        %612 = vmatprep.subr.mxu0 0.0
        %613 = vmatpush1.msra.mxu0 0.0
        %614 = vmatprep.subr.mxu0 0.0
        %615 = vmatpush1.msra.mxu0 0.0
        %616 = vmatprep.subr.mxu0 0.0
        %617 = vmatpush1.msra.mxu0 0.0
        %618 = vmatprep.subr.mxu0 0.0
        %619 = vmatpush1.msra.mxu0 0.0
        %620 = vmatprep.subr.mxu0 0.0
        %621 = vmatpush1.msra.mxu0 0.0
        %622 = vmatprep.subr.mxu0 0.0
        %623 = vmatpush1.msra.mxu0 0.0
        %624 = vmatprep.subr.mxu0 0.0
        %625 = vmatpush1.msra.mxu0 0.0
        %626 = vmatprep.subr.mxu0 0.0
        %627 = vmatpush1.msra.mxu0 0.0
        %628 = vmatprep.subr.mxu0 0.0
        %629 = vmatpush1.msra.mxu0 0.0
        %630 = vmatprep.subr.mxu0 0.0
        %631 = vmatpush1.msra.mxu0 0.0
        %632 = vmatprep.subr.mxu0 0.0
        %633 = vmatpush1.msra.mxu0 0.0
        %634 = vmatprep.subr.mxu0 0.0
        %635 = vmatpush1.msra.mxu0 0.0
        %636 = vmatprep.subr.mxu0 0.0
        %637 = vmatpush1.msra.mxu0 0.0
        %638 = vmatprep.subr.mxu0 0.0
        %639 = vmatpush1.msra.mxu0 0.0
        %640 = vmatprep.subr.mxu0 0.0
        %641 = vmatpush1.msra.mxu0 0.0
        %642 = vmatprep.subr.mxu0 0.0
        %643 = vmatpush1.msra.mxu0 0.0
        %644 = vmatprep.mubr.f32.mxu0 0.0
        %645 = vmatmul.mubr.f32.gmra.mrb[0].mxu0 %v575
        %v646 = vpop.f32.mrb[0].mxu0
        %v647 = vadd.f32 0.0, %v646
        %v648 = vpop.f32.mrb[0].mxu0
        %649 = vmatprep.mubr.f32.mxu0 0.0
        %650 = vmatmul.mubr.f32.gmra.mrb[0].mxu0 %v578
        %v651 = vpop.f32.mrb[0].mxu0
        %v652 = vadd.f32 0.0, %v651
        %v653 = vpop.f32.mrb[0].mxu0
        %654 = vdwg.mxu0
        %v655 = vsub.f32 %v647, %v515
        %v656 = vsub.f32 %v652, %v516
        %v657 = vmul.f32 %v248, %v248
        %v658 = vmul.f32 %v249, %v249
        %659 = vst.msk [vmem:[#allocation2 + $0x5] sm:$0xff] %vm250, %v657
        %660 = vst.msk [vmem:[#allocation2 + $0xd] sm:$0xff] %vm250, %v658
        %v661 = vmul.f32 %v657, 0.26601171
        %v662 = vmul.f32 %v658, 0.26601171
        %v663 = vld [vmem:[#allocation2 + $0x4] sm:$0xff]
        %v664 = vld [vmem:[#allocation2 + $0xc] sm:$0xff]
        %v665 = vld [vmem:[#allocation2 + $0x6] sm:$0xff]
        %v666 = vld [vmem:[#allocation2 + $0xe] sm:$0xff]
        %v667 = vadd.f32 %v663, %v665
        %v668 = vadd.f32 %v664, %v666
        %v669 = vmul.f32 %v667, 0.21300554
        %v670 = vmul.f32 %v668, 0.21300554
        %v671 = vadd.f32 %v661, %v669
        %v672 = vadd.f32 %v662, %v670
        %v673 = vld [vmem:[#allocation2 + $0x3] sm:$0xff]
        %v674 = vld [vmem:[#allocation2 + $0xb] sm:$0xff]
        %v675 = vld [vmem:[#allocation2 + $0x7] sm:$0xff]
        %v676 = vld [vmem:[#allocation2 + $0xf] sm:$0xff]
        %v677 = vadd.f32 %v673, %v675
        %v678 = vadd.f32 %v674, %v676
        %v679 = vmul.f32 %v677, 0.10936069
        %v680 = vmul.f32 %v678, 0.10936069
        %v681 = vadd.f32 %v671, %v679
        %v682 = vadd.f32 %v672, %v680
        %v683 = vld [vmem:[#allocation2 + $0x2] sm:$0xff]
        %v684 = vld [vmem:[#allocation2 + $0xa] sm:$0xff]
        %v685 = vld [vmem:[#allocation2 + $0x8] sm:$0xff]
        %v686 = vld [vmem:[#allocation2 + $0x10] sm:$0xff]
        %v687 = vadd.f32 %v683, %v685
        %v688 = vadd.f32 %v684, %v686
        %v689 = vmul.f32 %v687, 0.036000773
        %v690 = vmul.f32 %v688, 0.036000773
        %v691 = vadd.f32 %v681, %v689
        %v692 = vadd.f32 %v682, %v690
        %v693 = vld [vmem:[#allocation2 + $0x1] sm:$0xff]
        %v694 = vld [vmem:[#allocation2 + $0x9] sm:$0xff]
        %v695 = vld [vmem:[#allocation2 + $0x11] sm:$0xff]
        %v696 = vadd.f32 %v693, %v694
        %v697 = vadd.f32 %v694, %v695
        %v698 = vmul.f32 %v696, 0.007598758
        %v699 = vmul.f32 %v697, 0.007598758
        %v700 = vadd.f32 %v691, %v698
        %v701 = vadd.f32 %v692, %v699
        %v702 = vld [vmem:[#allocation2] sm:$0xff]
        %v703 = vld [vmem:[#allocation2 + $0x12] sm:$0xff]
        %v704 = vadd.f32 %v702, %v684
        %v705 = vadd.f32 %v685, %v703
        %v706 = vmul.f32 %v704, 0.0010283801
        %v707 = vmul.f32 %v705, 0.0010283801
        %v708 = vadd.f32 %v700, %v706
        %v709 = vadd.f32 %v701, %v707
        %v711 = vsel %vm250, %v708, 0
        %v714 = vsel %vm250, %v709, 0
        %716 = vmatprep.subr.mxu0 0.0
        %717 = vmatpush1.msra.mxu0 %v244
        %718 = vmatprep.subr.mxu0 0.0
        %719 = vmatpush1.msra.mxu0 %v245
        %720 = vmatprep.subr.mxu0 0.0
        %721 = vmatpush1.msra.mxu0 0.0
        %722 = vmatprep.subr.mxu0 0.0
        %723 = vmatpush1.msra.mxu0 0.0
        %724 = vmatprep.subr.mxu0 0.0
        %725 = vmatpush1.msra.mxu0 0.0
        %726 = vmatprep.subr.mxu0 0.0
        %727 = vmatpush1.msra.mxu0 0.0
        %728 = vmatprep.subr.mxu0 0.0
        %729 = vmatpush1.msra.mxu0 0.0
        %730 = vmatprep.subr.mxu0 0.0
        %731 = vmatpush1.msra.mxu0 0.0
        %732 = vmatprep.subr.mxu0 0.0
        %733 = vmatpush1.msra.mxu0 0.0
        %734 = vmatprep.subr.mxu0 0.0
        %735 = vmatpush1.msra.mxu0 0.0
        %736 = vmatprep.subr.mxu0 0.0
        %737 = vmatpush1.msra.mxu0 0.0
        %738 = vmatprep.subr.mxu0 0.0
        %739 = vmatpush1.msra.mxu0 0.0
        %740 = vmatprep.subr.mxu0 0.0
        %741 = vmatpush1.msra.mxu0 0.0
        %742 = vmatprep.subr.mxu0 0.0
        %743 = vmatpush1.msra.mxu0 0.0
        %744 = vmatprep.subr.mxu0 0.0
        %745 = vmatpush1.msra.mxu0 0.0
        %746 = vmatprep.subr.mxu0 0.0
        %747 = vmatpush1.msra.mxu0 0.0
        %748 = vmatprep.subr.mxu0 0.0
        %749 = vmatpush1.msra.mxu0 0.0
        %750 = vmatprep.subr.mxu0 0.0
        %751 = vmatpush1.msra.mxu0 0.0
        %752 = vmatprep.subr.mxu0 0.0
        %753 = vmatpush1.msra.mxu0 0.0
        %754 = vmatprep.subr.mxu0 0.0
        %755 = vmatpush1.msra.mxu0 0.0
        %756 = vmatprep.subr.mxu0 0.0
        %757 = vmatpush1.msra.mxu0 0.0
        %758 = vmatprep.subr.mxu0 0.0
        %759 = vmatpush1.msra.mxu0 0.0
        %760 = vmatprep.subr.mxu0 0.0
        %761 = vmatpush1.msra.mxu0 0.0
        %762 = vmatprep.subr.mxu0 0.0
        %763 = vmatpush1.msra.mxu0 0.0
        %764 = vmatprep.subr.mxu0 0.0
        %765 = vmatpush1.msra.mxu0 0.0
        %766 = vmatprep.subr.mxu0 0.0
        %767 = vmatpush1.msra.mxu0 0.0
        %768 = vmatprep.subr.mxu0 0.0
        %769 = vmatpush1.msra.mxu0 0.0
        %770 = vmatprep.subr.mxu0 0.0
        %771 = vmatpush1.msra.mxu0 0.0
        %772 = vmatprep.subr.mxu0 0.0
        %773 = vmatpush1.msra.mxu0 0.0
        %774 = vmatprep.subr.mxu0 0.0
        %775 = vmatpush1.msra.mxu0 0.0
        %776 = vmatprep.subr.mxu0 0.0
        %777 = vmatpush1.msra.mxu0 0.0
        %778 = vmatprep.subr.mxu0 0.0
        %779 = vmatpush1.msra.mxu0 0.0
        %780 = vmatprep.mubr.f32.mxu0 0.0
        %781 = vmatmul.mubr.f32.gmra.mrb[0].mxu0 %v711
        %v782 = vpop.f32.mrb[0].mxu0
        %v783 = vadd.f32 0.0, %v782
        %v784 = vpop.f32.mrb[0].mxu0
        %785 = vmatprep.mubr.f32.mxu0 0.0
        %786 = vmatmul.mubr.f32.gmra.mrb[0].mxu0 %v714
        %v787 = vpop.f32.mrb[0].mxu0
        %v788 = vadd.f32 0.0, %v787
        %v789 = vpop.f32.mrb[0].mxu0
        %790 = vdwg.mxu0
        %v791 = vsub.f32 %v783, %v517
        %v792 = vsub.f32 %v788, %v518
        %v793 = vmul.f32 %v246, %v248
        %v794 = vmul.f32 %v247, %v249
        %795 = vst.msk [vmem:[#allocation2 + $0x5] sm:$0xff] %vm250, %v793
        %796 = vst.msk [vmem:[#allocation2 + $0xd] sm:$0xff] %vm250, %v794
        %v797 = vmul.f32 %v793, 0.26601171
        %v798 = vmul.f32 %v794, 0.26601171
        %v799 = vld [vmem:[#allocation2 + $0x4] sm:$0xff]
        %v800 = vld [vmem:[#allocation2 + $0xc] sm:$0xff]
        %v801 = vld [vmem:[#allocation2 + $0x6] sm:$0xff]
        %v802 = vld [vmem:[#allocation2 + $0xe] sm:$0xff]
        %v803 = vadd.f32 %v799, %v801
        %v804 = vadd.f32 %v800, %v802
        %v805 = vmul.f32 %v803, 0.21300554
        %v806 = vmul.f32 %v804, 0.21300554
        %v807 = vadd.f32 %v797, %v805
        %v808 = vadd.f32 %v798, %v806
        %v809 = vld [vmem:[#allocation2 + $0x3] sm:$0xff]
        %v810 = vld [vmem:[#allocation2 + $0xb] sm:$0xff]
        %v811 = vld [vmem:[#allocation2 + $0x7] sm:$0xff]
        %v812 = vld [vmem:[#allocation2 + $0xf] sm:$0xff]
        %v813 = vadd.f32 %v809, %v811
        %v814 = vadd.f32 %v810, %v812
        %v815 = vmul.f32 %v813, 0.10936069
        %v816 = vmul.f32 %v814, 0.10936069
        %v817 = vadd.f32 %v807, %v815
        %v818 = vadd.f32 %v808, %v816
        %v819 = vld [vmem:[#allocation2 + $0x2] sm:$0xff]
        %v820 = vld [vmem:[#allocation2 + $0xa] sm:$0xff]
        %v821 = vld [vmem:[#allocation2 + $0x8] sm:$0xff]
        %v822 = vld [vmem:[#allocation2 + $0x10] sm:$0xff]
        %v823 = vadd.f32 %v819, %v821
        %v824 = vadd.f32 %v820, %v822
        %v825 = vmul.f32 %v823, 0.036000773
        %v826 = vmul.f32 %v824, 0.036000773
        %v827 = vadd.f32 %v817, %v825
        %v828 = vadd.f32 %v818, %v826
        %v829 = vld [vmem:[#allocation2 + $0x1] sm:$0xff]
        %v830 = vld [vmem:[#allocation2 + $0x9] sm:$0xff]
        %v831 = vld [vmem:[#allocation2 + $0x11] sm:$0xff]
        %v832 = vadd.f32 %v829, %v830
        %v833 = vadd.f32 %v830, %v831
        %v834 = vmul.f32 %v832, 0.007598758
        %v835 = vmul.f32 %v833, 0.007598758
        %v836 = vadd.f32 %v827, %v834
        %v837 = vadd.f32 %v828, %v835
        %v838 = vld [vmem:[#allocation2] sm:$0xff]
        %v839 = vld [vmem:[#allocation2 + $0x12] sm:$0xff]
        %v840 = vadd.f32 %v838, %v820
        %v841 = vadd.f32 %v821, %v839
        %v842 = vmul.f32 %v840, 0.0010283801
        %v843 = vmul.f32 %v841, 0.0010283801
        %v844 = vadd.f32 %v836, %v842
        %v845 = vadd.f32 %v837, %v843
        %v847 = vsel %vm250, %v844, 0
        %v850 = vsel %vm250, %v845, 0
        %852 = vmatprep.subr.mxu0 0.0
        %853 = vmatpush1.msra.mxu0 %v244
        %854 = vmatprep.subr.mxu0 0.0
        %855 = vmatpush1.msra.mxu0 %v245
        %856 = vmatprep.subr.mxu0 0.0
        %857 = vmatpush1.msra.mxu0 0.0
        %858 = vmatprep.subr.mxu0 0.0
        %859 = vmatpush1.msra.mxu0 0.0
        %860 = vmatprep.subr.mxu0 0.0
        %861 = vmatpush1.msra.mxu0 0.0
        %862 = vmatprep.subr.mxu0 0.0
        %863 = vmatpush1.msra.mxu0 0.0
        %864 = vmatprep.subr.mxu0 0.0
        %865 = vmatpush1.msra.mxu0 0.0
        %866 = vmatprep.subr.mxu0 0.0
        %867 = vmatpush1.msra.mxu0 0.0
        %868 = vmatprep.subr.mxu0 0.0
        %869 = vmatpush1.msra.mxu0 0.0
        %870 = vmatprep.subr.mxu0 0.0
        %871 = vmatpush1.msra.mxu0 0.0
        %872 = vmatprep.subr.mxu0 0.0
        %873 = vmatpush1.msra.mxu0 0.0
        %874 = vmatprep.subr.mxu0 0.0
        %875 = vmatpush1.msra.mxu0 0.0
        %876 = vmatprep.subr.mxu0 0.0
        %877 = vmatpush1.msra.mxu0 0.0
        %878 = vmatprep.subr.mxu0 0.0
        %879 = vmatpush1.msra.mxu0 0.0
        %880 = vmatprep.subr.mxu0 0.0
        %881 = vmatpush1.msra.mxu0 0.0
        %882 = vmatprep.subr.mxu0 0.0
        %883 = vmatpush1.msra.mxu0 0.0
        %884 = vmatprep.subr.mxu0 0.0
        %885 = vmatpush1.msra.mxu0 0.0
        %886 = vmatprep.subr.mxu0 0.0
        %887 = vmatpush1.msra.mxu0 0.0
        %888 = vmatprep.subr.mxu0 0.0
        %889 = vmatpush1.msra.mxu0 0.0
        %890 = vmatprep.subr.mxu0 0.0
        %891 = vmatpush1.msra.mxu0 0.0
        %892 = vmatprep.subr.mxu0 0.0
        %893 = vmatpush1.msra.mxu0 0.0
        %894 = vmatprep.subr.mxu0 0.0
        %895 = vmatpush1.msra.mxu0 0.0
        %896 = vmatprep.subr.mxu0 0.0
        %897 = vmatpush1.msra.mxu0 0.0
        %898 = vmatprep.subr.mxu0 0.0
        %899 = vmatpush1.msra.mxu0 0.0
        %900 = vmatprep.subr.mxu0 0.0
        %901 = vmatpush1.msra.mxu0 0.0
        %902 = vmatprep.subr.mxu0 0.0
        %903 = vmatpush1.msra.mxu0 0.0
        %904 = vmatprep.subr.mxu0 0.0
        %905 = vmatpush1.msra.mxu0 0.0
        %906 = vmatprep.subr.mxu0 0.0
        %907 = vmatpush1.msra.mxu0 0.0
        %908 = vmatprep.subr.mxu0 0.0
        %909 = vmatpush1.msra.mxu0 0.0
        %910 = vmatprep.subr.mxu0 0.0
        %911 = vmatpush1.msra.mxu0 0.0
        %912 = vmatprep.subr.mxu0 0.0
        %913 = vmatpush1.msra.mxu0 0.0
        %914 = vmatprep.subr.mxu0 0.0
        %915 = vmatpush1.msra.mxu0 0.0
        %916 = vmatprep.mubr.f32.mxu0 0.0
        %917 = vmatmul.mubr.f32.gmra.mrb[0].mxu0 %v847
        %v918 = vpop.f32.mrb[0].mxu0
        %v919 = vadd.f32 0.0, %v918
        %v920 = vpop.f32.mrb[0].mxu0
        %921 = vmatprep.mubr.f32.mxu0 0.0
        %922 = vmatmul.mubr.f32.gmra.mrb[0].mxu0 %v850
        %v923 = vpop.f32.mrb[0].mxu0
        %v924 = vadd.f32 0.0, %v923
        %v925 = vpop.f32.mrb[0].mxu0
        %926 = vdwg.mxu0
        %v927 = vsub.f32 %v919, %v519
        %v928 = vsub.f32 %v924, %v520
        %v929 = vmul.f32 %v519, 2.0
        %v930 = vmul.f32 %v520, 2.0
        %v931 = vadd.f32 %v929, 0.0001
        %v932 = vadd.f32 %v930, 0.0001
        %v933 = vmul.f32 %v927, 2.0
        %v934 = vmul.f32 %v928, 2.0
        %v935 = vadd.f32 %v933, 0.0009
        %v936 = vadd.f32 %v934, 0.0009
        %v937 = vmul.f32 %v931, %v935
        %v938 = vmul.f32 %v932, %v936
        %v939 = vadd.f32 %v515, %v517
        %v940 = vadd.f32 %v516, %v518
        %v941 = vadd.f32 %v939, 0.0001
        %v942 = vadd.f32 %v940, 0.0001
        %v943 = vadd.f32 %v655, %v791
        %v944 = vadd.f32 %v656, %v792
        %v945 = vadd.f32 %v943, 0.0009
        %v946 = vadd.f32 %v944, 0.0009
        %v947 = vmul.f32 %v941, %v945
        %v948 = vmul.f32 %v942, %v946
        %v949 = vrcp.pop %v947
        %v950 = vrcp.pop %v948
        %v951 = vmul.f32 %v937, %v949
        %v952 = vmul.f32 %v938, %v950
        %v953 = vsel %vm250, %v951, 0.0
        %v954 = vsel %vm250, %v952, 0.0
        %v955 = vadd.f32 %v953, %v954
        %956 = vadd.xlane.f32.xlu0 %v955
        %v957 = vpop.xlane.xlu0 %956
        %v958 = vrot.slane %v957, 4
        %v959 = vadd.f32 %v957, %v958
        %v960 = vrot.slane %v959, 2
        %v961 = vadd.f32 %v959, %v960
        %v962 = vrot.slane %v961, 1
        %v963 = vadd.f32 %v961, %v962
        %s964 = vtos %v963
        %v965 = vstv %s964
        %vm966 = vcmask 0
        %967 = vst.msk [vmem:[%s240] sm:$0x1] %vm966, %v965
        %p968 = scmp.lt.s32.totalorder %s20, 7
        %s969 = scalar_select %p968, %s20, 7
        %s970 = scalar_lea.vmem %s3, %s969
        // Predicated region
        $region45: #{tpu_custom_call.1} parent=31 // pred_check
          %p971 = pneg %p111
        $region46: #{tpu_custom_call.1} parent=31 // pred_check_branch
          %973 = sbr.rel (%p971) target = $region48
        $region47: #{tpu_custom_call.1} parent=31 // pred_region
          _
        $region48: #{tpu_custom_call.1} parent=31 // pred_fallthru
          _
      $region32: #{tpu_custom_call.1} parent=5 // pred_fallthru
        _
      %p974 = scmp.le.s32.totalorder 2, %s15
      // Predicated region
      $region49: #{tpu_custom_call.1} parent=5 // pred_check
        %p975 = pneg %p974
      $region50: #{tpu_custom_call.1} parent=5 // pred_check_branch
        %977 = sbr.rel (%p975) target = $region52
      $region51: #{tpu_custom_call.1} parent=5 // pred_region
        %s978 = ssub.s32 %s15, 2
        // Predicated region
        $region53: #{tpu_custom_call.1} parent=51 // pred_check
          %p979 = pneg %p117
        $region54: #{tpu_custom_call.1} parent=51 // pred_check_branch
          %981 = sbr.rel (%p979) target = $region56
        $region55: #{tpu_custom_call.1} parent=51 // pred_region
          %p982 = scmp.lt.s32.totalorder %s21, 7
          %s983 = scalar_select %p982, %s21, 7
          %s984 = scalar_lea.vmem %s3, %s983
        $region56: #{tpu_custom_call.1} parent=51 // pred_fallthru
          _
      $region52: #{tpu_custom_call.1} parent=5 // pred_fallthru
        _
    $region6: #{tpu_custom_call.1} parent=1 // loop_footer
      %s19 = sadd.s32 1, %s15
    $region7: #{tpu_custom_call.1} parent=1 // loop_footer_branch
      %14 = sbr.rel target = $region3
    $region8: #{tpu_custom_call.1} parent=1 // loop_exit
      _
    %985 = vsyncpa [#allocation4], 1
    %s986 = scalar_lea.sflag [#allocation4], 1
    %987 = vsyncpa %s986, 1
    %988 = vsyncpa [#allocation6], 1
    %s989 = scalar_lea.sflag [#allocation6], 1
    %990 = vsyncpa %s989, 1

</llo_original>
